<compile_context>
chip_gen: v7x
topology: tpu7x:2x2x1
jax: 0.10.0
libtpu: 0.0.40
codegen_flags: <defaults>
</compile_context>

<pallas_src>
import jax
import jax.numpy as jnp
from jax.experimental import pallas as pl
from jax.experimental.pallas import tpu as pltpu

C_LANES = 128      # every channel dim is zero-padded to 128 lanes
KSIZE = 3          # conv kernel size
HALO = 8           # aligned sublane offset used for the conv shift scratch


def _pick_batch_tile(batch):
    """Largest batch tile <= 16 dividing `batch` while keeping >= 2 grid steps."""
    for tb in (16, 8, 4, 2):
        if batch % tb == 0 and batch // tb >= 2:
            return tb
    return 1


def make_cnn_kernel(layer_lens, num_layers, tb):
    layer_lens = tuple(int(l) for l in layer_lens)

    def kernel(x_ref, w_ref, ss_ref, o_ref, p_ref, q_ref):
        # x_ref : (1, TB*L0, 128) bf16                   TB examples, channels on lanes
        # w_ref : (num_layers, 3, 128, 128) bf16         W[l, k, c_in, c_out] (resident)
        # ss_ref: (num_layers, 2, 128) f32               folded BN [scale; shift]
        # o_ref : (1, TB, 128) f32
        # p_ref : (HALO + TB*L0 + HALO, 128) f32         conv shift staging
        # q_ref : (TB*L0, 128) f32                       maxpool staging
        h = x_ref[0].astype(jnp.float32)                 # (TB*L0, 128)
        for l in range(num_layers):
            L = layer_lens[l]
            R = tb * L
            # ---- Conv1d(k=3, stride=1, pad=1) as 3 MXU matmuls on the
            # batch-flattened activation.  One aligned store + two shifted
            # reads; the center tap comes straight from registers.  Rows whose
            # shifted tap would read conv padding (or the neighbouring example)
            # are zeroed with a select, so no halo zero-fill is needed.
            p_ref[pl.ds(HALO, R), :] = h
            y_c = jnp.dot(h.astype(jnp.bfloat16), w_ref[l, 1],
                          preferred_element_type=jnp.float32)
            y_l = jnp.dot(p_ref[pl.ds(HALO - 1, R), :].astype(jnp.bfloat16),
                          w_ref[l, 0], preferred_element_type=jnp.float32)
            y_r = jnp.dot(p_ref[pl.ds(HALO + 1, R), :].astype(jnp.bfloat16),
                          w_ref[l, 2], preferred_element_type=jnp.float32)
            rid = jax.lax.broadcasted_iota(jnp.int32, (R, C_LANES), 0) % L
            acc = (y_c
                   + jnp.where(rid == 0, 0.0, y_l)
                   + jnp.where(rid == L - 1, 0.0, y_r))
            # ---- BatchNorm1d (eval-mode, folded) + ReLU ----
            ssl = ss_ref[l]                               # (2, 128) f32
            h = jnp.maximum(acc * ssl[0:1, :] + ssl[1:2, :], 0.0)
            # ---- MaxPool1d(kernel=2, stride=2) on every layer but the last;
            # pairs never cross example boundaries because L is even. ----
            if l < num_layers - 1:
                q_ref[pl.ds(0, R), :] = h
                h = jnp.maximum(q_ref[pl.ds(0, R // 2, stride=2), :],
                                q_ref[pl.ds(1, R // 2, stride=2), :])
        # ---- AdaptiveMaxPool1d(1) + Flatten: per-example segmented max over
        # the last L_last rows, assembled with strided reads so the final
        # store is a lane-dense (TB, 128) slab. ----
        L_last = layer_lens[num_layers - 1]
        q_ref[pl.ds(0, tb * L_last), :] = h
        o = q_ref[pl.ds(0, tb, stride=L_last), :]
        for j in range(1, L_last):
            o = jnp.maximum(o, q_ref[pl.ds(j, tb, stride=L_last), :])
        o_ref[0] = o

    return kernel


def cnn_forward(x_pad, w, ss, layer_lens, batch_tile=None):
    """x_pad: (B, L0, 128) bf16; w: (num_layers, 3, 128, 128) bf16; ss: (num_layers, 2, 128) f32."""
    B, L0, C = x_pad.shape
    num_layers = int(w.shape[0])
    assert C == C_LANES
    assert int(layer_lens[0]) == L0
    for l in range(num_layers - 1):
        assert layer_lens[l] % 2 == 0 and layer_lens[l + 1] == layer_lens[l] // 2

    tb = _pick_batch_tile(B) if batch_tile is None else batch_tile
    assert B % tb == 0
    grid_b = B // tb
    x_blk = x_pad.reshape(grid_b, tb * L0, C)
    kernel = make_cnn_kernel(layer_lens, num_layers, tb)

    flops = 2 * B * KSIZE * C * C * int(sum(layer_lens))
    bytes_accessed = (x_pad.size * x_pad.dtype.itemsize
                      + w.size * w.dtype.itemsize
                      + ss.size * ss.dtype.itemsize
                      + B * C * 4)

    out = pl.pallas_call(
        kernel,
        out_shape=jax.ShapeDtypeStruct((grid_b, tb, C), jnp.float32),
        grid_spec=pltpu.PrefetchScalarGridSpec(
            num_scalar_prefetch=0,
            grid=(grid_b,),
            in_specs=[
                pl.BlockSpec((1, tb * L0, C), lambda b: (b, 0, 0)),                  # x block
                pl.BlockSpec((num_layers, KSIZE, C, C), lambda b: (0, 0, 0, 0)),     # weights (resident)
                pl.BlockSpec((num_layers, 2, C), lambda b: (0, 0, 0)),               # BN scale/shift
            ],
            out_specs=pl.BlockSpec((1, tb, C), lambda b: (b, 0, 0)),
            scratch_shapes=[
                pltpu.VMEM((HALO + tb * L0 + HALO, C), jnp.float32),
                pltpu.VMEM((tb * L0, C), jnp.float32),
            ],
        ),
        compiler_params=pltpu.CompilerParams(
            dimension_semantics=("parallel",)),
        cost_estimate=pl.CostEstimate(flops=flops, transcendentals=0,
                                      bytes_accessed=bytes_accessed),
    )(x_blk, w, ss)
    return out.reshape(B, C)


def build_kernel_params(key, in_channel=1, num_layer=5, eps=1e-5):
    """PyTorch-equivalent Conv1d + BatchNorm1d(eval) params, folded & lane-padded."""
    predefined = [4, 16, 32, 64, 128]
    out_channels = [predefined[i] if i < len(predefined) else 128
                    for i in range(num_layer)]
    W = jnp.zeros((num_layer, KSIZE, C_LANES, C_LANES), jnp.float32)
    SS = jnp.zeros((num_layer, 2, C_LANES), jnp.float32)
    c_in = in_channel
    for l, c_out in enumerate(out_channels):
        key, kw, kb, kg, kbeta, km, kv = jax.random.split(key, 7)
        bound = 1.0 / float(c_in * KSIZE) ** 0.5
        w = jax.random.uniform(kw, (c_out, c_in, KSIZE), jnp.float32, -bound, bound)
        b = jax.random.uniform(kb, (c_out,), jnp.float32, -bound, bound)
        gamma = jax.random.uniform(kg, (c_out,), jnp.float32, 0.5, 1.5)
        beta = jax.random.uniform(kbeta, (c_out,), jnp.float32, -0.5, 0.5)
        running_mean = 0.1 * jax.random.normal(km, (c_out,), jnp.float32)
        running_var = jax.random.uniform(kv, (c_out,), jnp.float32, 0.5, 1.5)
        # Fold inference-mode BatchNorm1d + conv bias into scale/shift.
        scale = gamma / jnp.sqrt(running_var + eps)
        shift = beta + (b - running_mean) * scale
        # Store as W[l, k, c_in, c_out] so the kernel computes x_shifted @ W.
        W = W.at[l, :, :c_in, :c_out].set(jnp.transpose(w, (2, 1, 0)))
        SS = SS.at[l, 0, :c_out].set(scale)
        SS = SS.at[l, 1, :c_out].set(shift)
        c_in = c_out
    return W.astype(jnp.bfloat16), SS


def reference_forward(x_pad, w_bf16, ss):
    """Pure-JAX reference with identical bf16-weight / f32-accumulation numerics."""
    h = x_pad.astype(jnp.float32)                       # (B, L, 128)
    num_layers = w_bf16.shape[0]
    for l in range(num_layers):
        B, L, C = h.shape
        hp = jnp.pad(h, ((0, 0), (1, 1), (0, 0)))       # conv zero padding
        hb = hp.astype(jnp.bfloat16)
        ys = [jnp.einsum("blc,cd->bld", hb[:, k:k + L, :], w_bf16[l, k],
                         preferred_element_type=jnp.float32) for k in range(KSIZE)]
        acc = ys[1] + ys[0] + ys[2]                     # same order as the kernel
        h = jnp.maximum(acc * ss[l, 0][None, None, :] + ss[l, 1][None, None, :], 0.0)
        if l < num_layers - 1:
            h = jnp.maximum(h[:, 0::2, :], h[:, 1::2, :])   # MaxPool1d(2,2)
    return jnp.max(h, axis=1)                               # AdaptiveMaxPool1d(1)+Flatten


if __name__ == "__main__":
    key = jax.random.PRNGKey(0)
    k_x, k_p = jax.random.split(key)

    B, C_IN, L0 = 2, 1, 64
    NUM_LAYER = 5
    assert L0 % (2 ** (NUM_LAYER - 1)) == 0
    layer_lens = [L0 // (2 ** l) for l in range(NUM_LAYER)]   # [64, 32, 16, 8, 4]

    # PyTorch-style input (B, C_in, L)
    x_raw = jax.random.normal(k_x, (B, C_IN, L0), jnp.float32)
    W, SS = build_kernel_params(k_p, in_channel=C_IN, num_layer=NUM_LAYER)

    # channel-last layout, zero-padded to 128 lanes, bf16 to shrink the input DMA
    x_pad = jnp.zeros((B, L0, C_LANES), jnp.bfloat16)
    x_pad = x_pad.at[:, :, :C_IN].set(
        jnp.transpose(x_raw, (0, 2, 1)).astype(jnp.bfloat16))

    out = cnn_forward(x_pad, W, SS, layer_lens)
    out = jax.block_until_ready(out)

    ref = reference_forward(x_pad, W, SS)
    assert out.shape == (B, C_LANES)
    assert jnp.allclose(out, ref, atol=2e-3, rtol=2e-3), \
        float(jnp.max(jnp.abs(out - ref)))

    print("KERNEL_OK")
</pallas_src>

<mosaic_0001>
module attributes {stable_mosaic.version = 11 : i64} {
  func.func @kernel(%arg0: i32, %arg1: memref<1x64x128xbf16, #tpu.memory_space<vmem>>, %arg2: memref<5x3x128x128xbf16, #tpu.memory_space<vmem>>, %arg3: memref<5x2x128xf32, #tpu.memory_space<vmem>>, %arg4: memref<1x1x128xf32, #tpu.memory_space<vmem>>, %arg5: memref<80x128xf32, #tpu.memory_space<vmem>>, %arg6: memref<64x128xf32, #tpu.memory_space<vmem>>) attributes {dimension_semantics = [#tpu.dimension_semantics<parallel>], iteration_bounds = array<i64: 2>, scalar_prefetch = 0 : i64, scratch_operands = 2 : i64, tpu.core_type = #tpu.core_type<tc>, window_params = [{transform_indices = @transform_0, window_bounds = array<i64: 1, 64, 128>}, {pipeline_mode = #tpu.pipeline_mode<synchronous>, transform_indices = @transform_1, window_bounds = array<i64: 5, 3, 128, 128>}, {pipeline_mode = #tpu.pipeline_mode<synchronous>, transform_indices = @transform_2, window_bounds = array<i64: 5, 2, 128>}, {transform_indices = @transform_3, window_bounds = array<i64: 1, 1, 128>}]} {
    %c0 = arith.constant 0 : index
    %c0_0 = arith.constant 0 : index
    %c0_1 = arith.constant 0 : index
    %0 = vector.load %arg1[%c0, %c0_0, %c0_1] : memref<1x64x128xbf16, #tpu.memory_space<vmem>>, vector<1x64x128xbf16>
    %1 = vector.shape_cast %0 : vector<1x64x128xbf16> to vector<64x128xbf16>
    %2 = arith.extf %1 : vector<64x128xbf16> to vector<64x128xf32>
    %c8 = arith.constant 8 : index
    %c0_2 = arith.constant 0 : index
    %3 = vector.load %arg5[%c8, %c0_2] : memref<80x128xf32, #tpu.memory_space<vmem>>, vector<64x128xf32>
    tpu.vector_store %arg5[%c8, %c0_2], %2 {strides = array<i32>} : memref<80x128xf32, #tpu.memory_space<vmem>>, vector<64x128xf32>,
    %4 = arith.truncf %2 : vector<64x128xf32> to vector<64x128xbf16>
    %c0_3 = arith.constant 0 : index
    %c1 = arith.constant 1 : index
    %c0_4 = arith.constant 0 : index
    %c0_5 = arith.constant 0 : index
    %5 = vector.load %arg2[%c0_3, %c1, %c0_4, %c0_5] : memref<5x3x128x128xbf16, #tpu.memory_space<vmem>>, vector<1x1x128x128xbf16>
    %6 = vector.shape_cast %5 : vector<1x1x128x128xbf16> to vector<128x128xbf16>
    %cst = arith.constant dense<0.000000e+00> : vector<64x128xf32>
    %7 = tpu.matmul %4, %6, %cst {dimension_numbers = #tpu.dot_dimension_numbers<[1], [0], [0], [1], [0, 0, 1, 1], [], []>} : vector<64x128xbf16>, vector<128x128xbf16>, vector<64x128xf32> -> vector<64x128xf32>
    %c7 = arith.constant 7 : index
    %c0_6 = arith.constant 0 : index
    %8 = vector.load %arg5[%c7, %c0_6] : memref<80x128xf32, #tpu.memory_space<vmem>>, vector<64x128xf32>
    %9 = arith.truncf %8 : vector<64x128xf32> to vector<64x128xbf16>
    %c0_7 = arith.constant 0 : index
    %c0_8 = arith.constant 0 : index
    %c0_9 = arith.constant 0 : index
    %c0_10 = arith.constant 0 : index
    %10 = vector.load %arg2[%c0_7, %c0_8, %c0_9, %c0_10] : memref<5x3x128x128xbf16, #tpu.memory_space<vmem>>, vector<1x1x128x128xbf16>
    %11 = vector.shape_cast %10 : vector<1x1x128x128xbf16> to vector<128x128xbf16>
    %cst_11 = arith.constant dense<0.000000e+00> : vector<64x128xf32>
    %12 = tpu.matmul %9, %11, %cst_11 {dimension_numbers = #tpu.dot_dimension_numbers<[1], [0], [0], [1], [0, 0, 1, 1], [], []>} : vector<64x128xbf16>, vector<128x128xbf16>, vector<64x128xf32> -> vector<64x128xf32>
    %c9 = arith.constant 9 : index
    %c0_12 = arith.constant 0 : index
    %13 = vector.load %arg5[%c9, %c0_12] : memref<80x128xf32, #tpu.memory_space<vmem>>, vector<64x128xf32>
    %14 = arith.truncf %13 : vector<64x128xf32> to vector<64x128xbf16>
    %c0_13 = arith.constant 0 : index
    %c2 = arith.constant 2 : index
    %c0_14 = arith.constant 0 : index
    %c0_15 = arith.constant 0 : index
    %15 = vector.load %arg2[%c0_13, %c2, %c0_14, %c0_15] : memref<5x3x128x128xbf16, #tpu.memory_space<vmem>>, vector<1x1x128x128xbf16>
    %16 = vector.shape_cast %15 : vector<1x1x128x128xbf16> to vector<128x128xbf16>
    %cst_16 = arith.constant dense<0.000000e+00> : vector<64x128xf32>
    %17 = tpu.matmul %14, %16, %cst_16 {dimension_numbers = #tpu.dot_dimension_numbers<[1], [0], [0], [1], [0, 0, 1, 1], [], []>} : vector<64x128xbf16>, vector<128x128xbf16>, vector<64x128xf32> -> vector<64x128xf32>
    %18 = tpu.iota {dimensions = array<i32: 0>} : vector<64x128xi32>
    %c64_i32 = arith.constant 64 : i32
    %c0_i32 = arith.constant 0 : i32
    %19 = arith.cmpi eq, %c64_i32, %c0_i32 : i32
    %c1_i32 = arith.constant 1 : i32
    %20 = arith.select %19, %c1_i32, %c64_i32 : i32
    %21 = vector.broadcast %20 : i32 to vector<64x128xi32>
    %22 = arith.remsi %18, %21 : vector<64x128xi32>
    %c0_i32_17 = arith.constant 0 : i32
    %23 = vector.broadcast %c0_i32_17 : i32 to vector<64x128xi32>
    %24 = arith.cmpi ne, %22, %23 : vector<64x128xi32>
    %c0_i32_18 = arith.constant 0 : i32
    %25 = vector.broadcast %c0_i32_18 : i32 to vector<64x128xi32>
    %26 = arith.cmpi slt, %22, %25 : vector<64x128xi32>
    %c0_i32_19 = arith.constant 0 : i32
    %27 = arith.cmpi slt, %20, %c0_i32_19 : i32
    %28 = vector.broadcast %27 : i1 to vector<64x128xi1>
    %29 = vector.broadcast %28 : vector<64x128xi1> to vector<64x128xi1>
    %30 = arith.xori %26, %29 : vector<64x128xi1>
    %31 = arith.andi %30, %24 : vector<64x128xi1>
    %32 = vector.broadcast %20 : i32 to vector<64x128xi32>
    %33 = arith.addi %22, %32 : vector<64x128xi32>
    %34 = arith.select %31, %33, %22 : vector<64x128xi1>, vector<64x128xi32>
    %c0_i32_20 = arith.constant 0 : i32
    %35 = vector.broadcast %c0_i32_20 : i32 to vector<64x128xi32>
    %36 = arith.cmpi eq, %34, %35 : vector<64x128xi32>
    %cst_21 = arith.constant 0.000000e+00 : f32
    %37 = vector.broadcast %cst_21 : f32 to vector<64x128xf32>
    %38 = arith.select %36, %37, %12 : vector<64x128xi1>, vector<64x128xf32>
    %39 = arith.addf %7, %38 : vector<64x128xf32>
    %c63_i32 = arith.constant 63 : i32
    %40 = vector.broadcast %c63_i32 : i32 to vector<64x128xi32>
    %41 = arith.cmpi eq, %34, %40 : vector<64x128xi32>
    %cst_22 = arith.constant 0.000000e+00 : f32
    %42 = vector.broadcast %cst_22 : f32 to vector<64x128xf32>
    %43 = arith.select %41, %42, %17 : vector<64x128xi1>, vector<64x128xf32>
    %44 = arith.addf %39, %43 : vector<64x128xf32>
    %c0_23 = arith.constant 0 : index
    %c0_24 = arith.constant 0 : index
    %c0_25 = arith.constant 0 : index
    %45 = vector.load %arg3[%c0_23, %c0_24, %c0_25] : memref<5x2x128xf32, #tpu.memory_space<vmem>>, vector<1x2x128xf32>
    %46 = vector.shape_cast %45 : vector<1x2x128xf32> to vector<2x128xf32>
    %47 = vector.extract_strided_slice %46 {offsets = [0, 0], sizes = [1, 128], strides = [1, 1]} : vector<2x128xf32> to vector<1x128xf32>
    %48 = vector.broadcast %47 : vector<1x128xf32> to vector<64x128xf32>
    %49 = arith.mulf %44, %48 : vector<64x128xf32>
    %50 = vector.extract_strided_slice %46 {offsets = [1, 0], sizes = [1, 128], strides = [1, 1]} : vector<2x128xf32> to vector<1x128xf32>
    %51 = vector.broadcast %50 : vector<1x128xf32> to vector<64x128xf32>
    %52 = arith.addf %49, %51 : vector<64x128xf32>
    %cst_26 = arith.constant 0.000000e+00 : f32
    %53 = vector.broadcast %cst_26 : f32 to vector<64x128xf32>
    %54 = arith.maximumf %52, %53 : vector<64x128xf32>
    %c0_27 = arith.constant 0 : index
    %c0_28 = arith.constant 0 : index
    %55 = vector.load %arg6[%c0_27, %c0_28] : memref<64x128xf32, #tpu.memory_space<vmem>>, vector<64x128xf32>
    tpu.vector_store %arg6[%c0_27, %c0_28], %54 {strides = array<i32>} : memref<64x128xf32, #tpu.memory_space<vmem>>, vector<64x128xf32>,
    %c0_29 = arith.constant 0 : index
    %c0_30 = arith.constant 0 : index
    %56 = tpu.strided_load %arg6[%c0_29, %c0_30] {strides = array<i32: 2, 1>} : memref<64x128xf32, #tpu.memory_space<vmem>>, vector<32x128xf32>
    %c1_31 = arith.constant 1 : index
    %c0_32 = arith.constant 0 : index
    %57 = tpu.strided_load %arg6[%c1_31, %c0_32] {strides = array<i32: 2, 1>} : memref<64x128xf32, #tpu.memory_space<vmem>>, vector<32x128xf32>
    %58 = arith.maximumf %56, %57 : vector<32x128xf32>
    %c8_33 = arith.constant 8 : index
    %c0_34 = arith.constant 0 : index
    %59 = vector.load %arg5[%c8_33, %c0_34] : memref<80x128xf32, #tpu.memory_space<vmem>>, vector<32x128xf32>
    tpu.vector_store %arg5[%c8_33, %c0_34], %58 {strides = array<i32>} : memref<80x128xf32, #tpu.memory_space<vmem>>, vector<32x128xf32>,
    %60 = arith.truncf %58 : vector<32x128xf32> to vector<32x128xbf16>
    %c1_35 = arith.constant 1 : index
    %c1_36 = arith.constant 1 : index
    %c0_37 = arith.constant 0 : index
    %c0_38 = arith.constant 0 : index
    %61 = vector.load %arg2[%c1_35, %c1_36, %c0_37, %c0_38] : memref<5x3x128x128xbf16, #tpu.memory_space<vmem>>, vector<1x1x128x128xbf16>
    %62 = vector.shape_cast %61 : vector<1x1x128x128xbf16> to vector<128x128xbf16>
    %cst_39 = arith.constant dense<0.000000e+00> : vector<32x128xf32>
    %63 = tpu.matmul %60, %62, %cst_39 {dimension_numbers = #tpu.dot_dimension_numbers<[1], [0], [0], [1], [0, 0, 1, 1], [], []>} : vector<32x128xbf16>, vector<128x128xbf16>, vector<32x128xf32> -> vector<32x128xf32>
    %c7_40 = arith.constant 7 : index
    %c0_41 = arith.constant 0 : index
    %64 = vector.load %arg5[%c7_40, %c0_41] : memref<80x128xf32, #tpu.memory_space<vmem>>, vector<32x128xf32>
    %65 = arith.truncf %64 : vector<32x128xf32> to vector<32x128xbf16>
    %c1_42 = arith.constant 1 : index
    %c0_43 = arith.constant 0 : index
    %c0_44 = arith.constant 0 : index
    %c0_45 = arith.constant 0 : index
    %66 = vector.load %arg2[%c1_42, %c0_43, %c0_44, %c0_45] : memref<5x3x128x128xbf16, #tpu.memory_space<vmem>>, vector<1x1x128x128xbf16>
    %67 = vector.shape_cast %66 : vector<1x1x128x128xbf16> to vector<128x128xbf16>
    %cst_46 = arith.constant dense<0.000000e+00> : vector<32x128xf32>
    %68 = tpu.matmul %65, %67, %cst_46 {dimension_numbers = #tpu.dot_dimension_numbers<[1], [0], [0], [1], [0, 0, 1, 1], [], []>} : vector<32x128xbf16>, vector<128x128xbf16>, vector<32x128xf32> -> vector<32x128xf32>
    %c9_47 = arith.constant 9 : index
    %c0_48 = arith.constant 0 : index
    %69 = vector.load %arg5[%c9_47, %c0_48] : memref<80x128xf32, #tpu.memory_space<vmem>>, vector<32x128xf32>
    %70 = arith.truncf %69 : vector<32x128xf32> to vector<32x128xbf16>
    %c1_49 = arith.constant 1 : index
    %c2_50 = arith.constant 2 : index
    %c0_51 = arith.constant 0 : index
    %c0_52 = arith.constant 0 : index
    %71 = vector.load %arg2[%c1_49, %c2_50, %c0_51, %c0_52] : memref<5x3x128x128xbf16, #tpu.memory_space<vmem>>, vector<1x1x128x128xbf16>
    %72 = vector.shape_cast %71 : vector<1x1x128x128xbf16> to vector<128x128xbf16>
    %cst_53 = arith.constant dense<0.000000e+00> : vector<32x128xf32>
    %73 = tpu.matmul %70, %72, %cst_53 {dimension_numbers = #tpu.dot_dimension_numbers<[1], [0], [0], [1], [0, 0, 1, 1], [], []>} : vector<32x128xbf16>, vector<128x128xbf16>, vector<32x128xf32> -> vector<32x128xf32>
    %74 = tpu.iota {dimensions = array<i32: 0>} : vector<32x128xi32>
    %c32_i32 = arith.constant 32 : i32
    %c0_i32_54 = arith.constant 0 : i32
    %75 = arith.cmpi eq, %c32_i32, %c0_i32_54 : i32
    %c1_i32_55 = arith.constant 1 : i32
    %76 = arith.select %75, %c1_i32_55, %c32_i32 : i32
    %77 = vector.broadcast %76 : i32 to vector<32x128xi32>
    %78 = arith.remsi %74, %77 : vector<32x128xi32>
    %c0_i32_56 = arith.constant 0 : i32
    %79 = vector.broadcast %c0_i32_56 : i32 to vector<32x128xi32>
    %80 = arith.cmpi ne, %78, %79 : vector<32x128xi32>
    %c0_i32_57 = arith.constant 0 : i32
    %81 = vector.broadcast %c0_i32_57 : i32 to vector<32x128xi32>
    %82 = arith.cmpi slt, %78, %81 : vector<32x128xi32>
    %c0_i32_58 = arith.constant 0 : i32
    %83 = arith.cmpi slt, %76, %c0_i32_58 : i32
    %84 = vector.broadcast %83 : i1 to vector<32x128xi1>
    %85 = vector.broadcast %84 : vector<32x128xi1> to vector<32x128xi1>
    %86 = arith.xori %82, %85 : vector<32x128xi1>
    %87 = arith.andi %86, %80 : vector<32x128xi1>
    %88 = vector.broadcast %76 : i32 to vector<32x128xi32>
    %89 = arith.addi %78, %88 : vector<32x128xi32>
    %90 = arith.select %87, %89, %78 : vector<32x128xi1>, vector<32x128xi32>
    %c0_i32_59 = arith.constant 0 : i32
    %91 = vector.broadcast %c0_i32_59 : i32 to vector<32x128xi32>
    %92 = arith.cmpi eq, %90, %91 : vector<32x128xi32>
    %cst_60 = arith.constant 0.000000e+00 : f32
    %93 = vector.broadcast %cst_60 : f32 to vector<32x128xf32>
    %94 = arith.select %92, %93, %68 : vector<32x128xi1>, vector<32x128xf32>
    %95 = arith.addf %63, %94 : vector<32x128xf32>
    %c31_i32 = arith.constant 31 : i32
    %96 = vector.broadcast %c31_i32 : i32 to vector<32x128xi32>
    %97 = arith.cmpi eq, %90, %96 : vector<32x128xi32>
    %cst_61 = arith.constant 0.000000e+00 : f32
    %98 = vector.broadcast %cst_61 : f32 to vector<32x128xf32>
    %99 = arith.select %97, %98, %73 : vector<32x128xi1>, vector<32x128xf32>
    %100 = arith.addf %95, %99 : vector<32x128xf32>
    %c1_62 = arith.constant 1 : index
    %c0_63 = arith.constant 0 : index
    %c0_64 = arith.constant 0 : index
    %101 = vector.load %arg3[%c1_62, %c0_63, %c0_64] : memref<5x2x128xf32, #tpu.memory_space<vmem>>, vector<1x2x128xf32>
    %102 = vector.shape_cast %101 : vector<1x2x128xf32> to vector<2x128xf32>
    %103 = vector.extract_strided_slice %102 {offsets = [0, 0], sizes = [1, 128], strides = [1, 1]} : vector<2x128xf32> to vector<1x128xf32>
    %104 = vector.broadcast %103 : vector<1x128xf32> to vector<32x128xf32>
    %105 = arith.mulf %100, %104 : vector<32x128xf32>
    %106 = vector.extract_strided_slice %102 {offsets = [1, 0], sizes = [1, 128], strides = [1, 1]} : vector<2x128xf32> to vector<1x128xf32>
    %107 = vector.broadcast %106 : vector<1x128xf32> to vector<32x128xf32>
    %108 = arith.addf %105, %107 : vector<32x128xf32>
    %cst_65 = arith.constant 0.000000e+00 : f32
    %109 = vector.broadcast %cst_65 : f32 to vector<32x128xf32>
    %110 = arith.maximumf %108, %109 : vector<32x128xf32>
    %c0_66 = arith.constant 0 : index
    %c0_67 = arith.constant 0 : index
    %111 = vector.load %arg6[%c0_66, %c0_67] : memref<64x128xf32, #tpu.memory_space<vmem>>, vector<32x128xf32>
    tpu.vector_store %arg6[%c0_66, %c0_67], %110 {strides = array<i32>} : memref<64x128xf32, #tpu.memory_space<vmem>>, vector<32x128xf32>,
    %c0_68 = arith.constant 0 : index
    %c0_69 = arith.constant 0 : index
    %112 = tpu.strided_load %arg6[%c0_68, %c0_69] {strides = array<i32: 2, 1>} : memref<64x128xf32, #tpu.memory_space<vmem>>, vector<16x128xf32>
    %c1_70 = arith.constant 1 : index
    %c0_71 = arith.constant 0 : index
    %113 = tpu.strided_load %arg6[%c1_70, %c0_71] {strides = array<i32: 2, 1>} : memref<64x128xf32, #tpu.memory_space<vmem>>, vector<16x128xf32>
    %114 = arith.maximumf %112, %113 : vector<16x128xf32>
    %c8_72 = arith.constant 8 : index
    %c0_73 = arith.constant 0 : index
    %115 = vector.load %arg5[%c8_72, %c0_73] : memref<80x128xf32, #tpu.memory_space<vmem>>, vector<16x128xf32>
    tpu.vector_store %arg5[%c8_72, %c0_73], %114 {strides = array<i32>} : memref<80x128xf32, #tpu.memory_space<vmem>>, vector<16x128xf32>,
    %116 = arith.truncf %114 : vector<16x128xf32> to vector<16x128xbf16>
    %c2_74 = arith.constant 2 : index
    %c1_75 = arith.constant 1 : index
    %c0_76 = arith.constant 0 : index
    %c0_77 = arith.constant 0 : index
    %117 = vector.load %arg2[%c2_74, %c1_75, %c0_76, %c0_77] : memref<5x3x128x128xbf16, #tpu.memory_space<vmem>>, vector<1x1x128x128xbf16>
    %118 = vector.shape_cast %117 : vector<1x1x128x128xbf16> to vector<128x128xbf16>
    %cst_78 = arith.constant dense<0.000000e+00> : vector<16x128xf32>
    %119 = tpu.matmul %116, %118, %cst_78 {dimension_numbers = #tpu.dot_dimension_numbers<[1], [0], [0], [1], [0, 0, 1, 1], [], []>} : vector<16x128xbf16>, vector<128x128xbf16>, vector<16x128xf32> -> vector<16x128xf32>
    %c7_79 = arith.constant 7 : index
    %c0_80 = arith.constant 0 : index
    %120 = vector.load %arg5[%c7_79, %c0_80] : memref<80x128xf32, #tpu.memory_space<vmem>>, vector<16x128xf32>
    %121 = arith.truncf %120 : vector<16x128xf32> to vector<16x128xbf16>
    %c2_81 = arith.constant 2 : index
    %c0_82 = arith.constant 0 : index
    %c0_83 = arith.constant 0 : index
    %c0_84 = arith.constant 0 : index
    %122 = vector.load %arg2[%c2_81, %c0_82, %c0_83, %c0_84] : memref<5x3x128x128xbf16, #tpu.memory_space<vmem>>, vector<1x1x128x128xbf16>
    %123 = vector.shape_cast %122 : vector<1x1x128x128xbf16> to vector<128x128xbf16>
    %cst_85 = arith.constant dense<0.000000e+00> : vector<16x128xf32>
    %124 = tpu.matmul %121, %123, %cst_85 {dimension_numbers = #tpu.dot_dimension_numbers<[1], [0], [0], [1], [0, 0, 1, 1], [], []>} : vector<16x128xbf16>, vector<128x128xbf16>, vector<16x128xf32> -> vector<16x128xf32>
    %c9_86 = arith.constant 9 : index
    %c0_87 = arith.constant 0 : index
    %125 = vector.load %arg5[%c9_86, %c0_87] : memref<80x128xf32, #tpu.memory_space<vmem>>, vector<16x128xf32>
    %126 = arith.truncf %125 : vector<16x128xf32> to vector<16x128xbf16>
    %c2_88 = arith.constant 2 : index
    %c2_89 = arith.constant 2 : index
    %c0_90 = arith.constant 0 : index
    %c0_91 = arith.constant 0 : index
    %127 = vector.load %arg2[%c2_88, %c2_89, %c0_90, %c0_91] : memref<5x3x128x128xbf16, #tpu.memory_space<vmem>>, vector<1x1x128x128xbf16>
    %128 = vector.shape_cast %127 : vector<1x1x128x128xbf16> to vector<128x128xbf16>
    %cst_92 = arith.constant dense<0.000000e+00> : vector<16x128xf32>
    %129 = tpu.matmul %126, %128, %cst_92 {dimension_numbers = #tpu.dot_dimension_numbers<[1], [0], [0], [1], [0, 0, 1, 1], [], []>} : vector<16x128xbf16>, vector<128x128xbf16>, vector<16x128xf32> -> vector<16x128xf32>
    %130 = tpu.iota {dimensions = array<i32: 0>} : vector<16x128xi32>
    %c16_i32 = arith.constant 16 : i32
    %c0_i32_93 = arith.constant 0 : i32
    %131 = arith.cmpi eq, %c16_i32, %c0_i32_93 : i32
    %c1_i32_94 = arith.constant 1 : i32
    %132 = arith.select %131, %c1_i32_94, %c16_i32 : i32
    %133 = vector.broadcast %132 : i32 to vector<16x128xi32>
    %134 = arith.remsi %130, %133 : vector<16x128xi32>
    %c0_i32_95 = arith.constant 0 : i32
    %135 = vector.broadcast %c0_i32_95 : i32 to vector<16x128xi32>
    %136 = arith.cmpi ne, %134, %135 : vector<16x128xi32>
    %c0_i32_96 = arith.constant 0 : i32
    %137 = vector.broadcast %c0_i32_96 : i32 to vector<16x128xi32>
    %138 = arith.cmpi slt, %134, %137 : vector<16x128xi32>
    %c0_i32_97 = arith.constant 0 : i32
    %139 = arith.cmpi slt, %132, %c0_i32_97 : i32
    %140 = vector.broadcast %139 : i1 to vector<16x128xi1>
    %141 = vector.broadcast %140 : vector<16x128xi1> to vector<16x128xi1>
    %142 = arith.xori %138, %141 : vector<16x128xi1>
    %143 = arith.andi %142, %136 : vector<16x128xi1>
    %144 = vector.broadcast %132 : i32 to vector<16x128xi32>
    %145 = arith.addi %134, %144 : vector<16x128xi32>
    %146 = arith.select %143, %145, %134 : vector<16x128xi1>, vector<16x128xi32>
    %c0_i32_98 = arith.constant 0 : i32
    %147 = vector.broadcast %c0_i32_98 : i32 to vector<16x128xi32>
    %148 = arith.cmpi eq, %146, %147 : vector<16x128xi32>
    %cst_99 = arith.constant 0.000000e+00 : f32
    %149 = vector.broadcast %cst_99 : f32 to vector<16x128xf32>
    %150 = arith.select %148, %149, %124 : vector<16x128xi1>, vector<16x128xf32>
    %151 = arith.addf %119, %150 : vector<16x128xf32>
    %c15_i32 = arith.constant 15 : i32
    %152 = vector.broadcast %c15_i32 : i32 to vector<16x128xi32>
    %153 = arith.cmpi eq, %146, %152 : vector<16x128xi32>
    %cst_100 = arith.constant 0.000000e+00 : f32
    %154 = vector.broadcast %cst_100 : f32 to vector<16x128xf32>
    %155 = arith.select %153, %154, %129 : vector<16x128xi1>, vector<16x128xf32>
    %156 = arith.addf %151, %155 : vector<16x128xf32>
    %c2_101 = arith.constant 2 : index
    %c0_102 = arith.constant 0 : index
    %c0_103 = arith.constant 0 : index
    %157 = vector.load %arg3[%c2_101, %c0_102, %c0_103] : memref<5x2x128xf32, #tpu.memory_space<vmem>>, vector<1x2x128xf32>
    %158 = vector.shape_cast %157 : vector<1x2x128xf32> to vector<2x128xf32>
    %159 = vector.extract_strided_slice %158 {offsets = [0, 0], sizes = [1, 128], strides = [1, 1]} : vector<2x128xf32> to vector<1x128xf32>
    %160 = vector.broadcast %159 : vector<1x128xf32> to vector<16x128xf32>
    %161 = arith.mulf %156, %160 : vector<16x128xf32>
    %162 = vector.extract_strided_slice %158 {offsets = [1, 0], sizes = [1, 128], strides = [1, 1]} : vector<2x128xf32> to vector<1x128xf32>
    %163 = vector.broadcast %162 : vector<1x128xf32> to vector<16x128xf32>
    %164 = arith.addf %161, %163 : vector<16x128xf32>
    %cst_104 = arith.constant 0.000000e+00 : f32
    %165 = vector.broadcast %cst_104 : f32 to vector<16x128xf32>
    %166 = arith.maximumf %164, %165 : vector<16x128xf32>
    %c0_105 = arith.constant 0 : index
    %c0_106 = arith.constant 0 : index
    %167 = vector.load %arg6[%c0_105, %c0_106] : memref<64x128xf32, #tpu.memory_space<vmem>>, vector<16x128xf32>
    tpu.vector_store %arg6[%c0_105, %c0_106], %166 {strides = array<i32>} : memref<64x128xf32, #tpu.memory_space<vmem>>, vector<16x128xf32>,
    %c0_107 = arith.constant 0 : index
    %c0_108 = arith.constant 0 : index
    %168 = tpu.strided_load %arg6[%c0_107, %c0_108] {strides = array<i32: 2, 1>} : memref<64x128xf32, #tpu.memory_space<vmem>>, vector<8x128xf32>
    %c1_109 = arith.constant 1 : index
    %c0_110 = arith.constant 0 : index
    %169 = tpu.strided_load %arg6[%c1_109, %c0_110] {strides = array<i32: 2, 1>} : memref<64x128xf32, #tpu.memory_space<vmem>>, vector<8x128xf32>
    %170 = arith.maximumf %168, %169 : vector<8x128xf32>
    %c8_111 = arith.constant 8 : index
    %c0_112 = arith.constant 0 : index
    %171 = vector.load %arg5[%c8_111, %c0_112] : memref<80x128xf32, #tpu.memory_space<vmem>>, vector<8x128xf32>
    tpu.vector_store %arg5[%c8_111, %c0_112], %170 {strides = array<i32>} : memref<80x128xf32, #tpu.memory_space<vmem>>, vector<8x128xf32>,
    %172 = arith.truncf %170 : vector<8x128xf32> to vector<8x128xbf16>
    %c3 = arith.constant 3 : index
    %c1_113 = arith.constant 1 : index
    %c0_114 = arith.constant 0 : index
    %c0_115 = arith.constant 0 : index
    %173 = vector.load %arg2[%c3, %c1_113, %c0_114, %c0_115] : memref<5x3x128x128xbf16, #tpu.memory_space<vmem>>, vector<1x1x128x128xbf16>
    %174 = vector.shape_cast %173 : vector<1x1x128x128xbf16> to vector<128x128xbf16>
    %cst_116 = arith.constant dense<0.000000e+00> : vector<8x128xf32>
    %175 = tpu.matmul %172, %174, %cst_116 {dimension_numbers = #tpu.dot_dimension_numbers<[1], [0], [0], [1], [0, 0, 1, 1], [], []>} : vector<8x128xbf16>, vector<128x128xbf16>, vector<8x128xf32> -> vector<8x128xf32>
    %c7_117 = arith.constant 7 : index
    %c0_118 = arith.constant 0 : index
    %176 = vector.load %arg5[%c7_117, %c0_118] : memref<80x128xf32, #tpu.memory_space<vmem>>, vector<8x128xf32>
    %177 = arith.truncf %176 : vector<8x128xf32> to vector<8x128xbf16>
    %c3_119 = arith.constant 3 : index
    %c0_120 = arith.constant 0 : index
    %c0_121 = arith.constant 0 : index
    %c0_122 = arith.constant 0 : index
    %178 = vector.load %arg2[%c3_119, %c0_120, %c0_121, %c0_122] : memref<5x3x128x128xbf16, #tpu.memory_space<vmem>>, vector<1x1x128x128xbf16>
    %179 = vector.shape_cast %178 : vector<1x1x128x128xbf16> to vector<128x128xbf16>
    %cst_123 = arith.constant dense<0.000000e+00> : vector<8x128xf32>
    %180 = tpu.matmul %177, %179, %cst_123 {dimension_numbers = #tpu.dot_dimension_numbers<[1], [0], [0], [1], [0, 0, 1, 1], [], []>} : vector<8x128xbf16>, vector<128x128xbf16>, vector<8x128xf32> -> vector<8x128xf32>
    %c9_124 = arith.constant 9 : index
    %c0_125 = arith.constant 0 : index
    %181 = vector.load %arg5[%c9_124, %c0_125] : memref<80x128xf32, #tpu.memory_space<vmem>>, vector<8x128xf32>
    %182 = arith.truncf %181 : vector<8x128xf32> to vector<8x128xbf16>
    %c3_126 = arith.constant 3 : index
    %c2_127 = arith.constant 2 : index
    %c0_128 = arith.constant 0 : index
    %c0_129 = arith.constant 0 : index
    %183 = vector.load %arg2[%c3_126, %c2_127, %c0_128, %c0_129] : memref<5x3x128x128xbf16, #tpu.memory_space<vmem>>, vector<1x1x128x128xbf16>
    %184 = vector.shape_cast %183 : vector<1x1x128x128xbf16> to vector<128x128xbf16>
    %cst_130 = arith.constant dense<0.000000e+00> : vector<8x128xf32>
    %185 = tpu.matmul %182, %184, %cst_130 {dimension_numbers = #tpu.dot_dimension_numbers<[1], [0], [0], [1], [0, 0, 1, 1], [], []>} : vector<8x128xbf16>, vector<128x128xbf16>, vector<8x128xf32> -> vector<8x128xf32>
    %186 = tpu.iota {dimensions = array<i32: 0>} : vector<8x128xi32>
    %c8_i32 = arith.constant 8 : i32
    %c0_i32_131 = arith.constant 0 : i32
    %187 = arith.cmpi eq, %c8_i32, %c0_i32_131 : i32
    %c1_i32_132 = arith.constant 1 : i32
    %188 = arith.select %187, %c1_i32_132, %c8_i32 : i32
    %189 = vector.broadcast %188 : i32 to vector<8x128xi32>
    %190 = arith.remsi %186, %189 : vector<8x128xi32>
    %c0_i32_133 = arith.constant 0 : i32
    %191 = vector.broadcast %c0_i32_133 : i32 to vector<8x128xi32>
    %192 = arith.cmpi ne, %190, %191 : vector<8x128xi32>
    %c0_i32_134 = arith.constant 0 : i32
    %193 = vector.broadcast %c0_i32_134 : i32 to vector<8x128xi32>
    %194 = arith.cmpi slt, %190, %193 : vector<8x128xi32>
    %c0_i32_135 = arith.constant 0 : i32
    %195 = arith.cmpi slt, %188, %c0_i32_135 : i32
    %196 = vector.broadcast %195 : i1 to vector<8x128xi1>
    %197 = vector.broadcast %196 : vector<8x128xi1> to vector<8x128xi1>
    %198 = arith.xori %194, %197 : vector<8x128xi1>
    %199 = arith.andi %198, %192 : vector<8x128xi1>
    %200 = vector.broadcast %188 : i32 to vector<8x128xi32>
    %201 = arith.addi %190, %200 : vector<8x128xi32>
    %202 = arith.select %199, %201, %190 : vector<8x128xi1>, vector<8x128xi32>
    %c0_i32_136 = arith.constant 0 : i32
    %203 = vector.broadcast %c0_i32_136 : i32 to vector<8x128xi32>
    %204 = arith.cmpi eq, %202, %203 : vector<8x128xi32>
    %cst_137 = arith.constant 0.000000e+00 : f32
    %205 = vector.broadcast %cst_137 : f32 to vector<8x128xf32>
    %206 = arith.select %204, %205, %180 : vector<8x128xi1>, vector<8x128xf32>
    %207 = arith.addf %175, %206 : vector<8x128xf32>
    %c7_i32 = arith.constant 7 : i32
    %208 = vector.broadcast %c7_i32 : i32 to vector<8x128xi32>
    %209 = arith.cmpi eq, %202, %208 : vector<8x128xi32>
    %cst_138 = arith.constant 0.000000e+00 : f32
    %210 = vector.broadcast %cst_138 : f32 to vector<8x128xf32>
    %211 = arith.select %209, %210, %185 : vector<8x128xi1>, vector<8x128xf32>
    %212 = arith.addf %207, %211 : vector<8x128xf32>
    %c3_139 = arith.constant 3 : index
    %c0_140 = arith.constant 0 : index
    %c0_141 = arith.constant 0 : index
    %213 = vector.load %arg3[%c3_139, %c0_140, %c0_141] : memref<5x2x128xf32, #tpu.memory_space<vmem>>, vector<1x2x128xf32>
    %214 = vector.shape_cast %213 : vector<1x2x128xf32> to vector<2x128xf32>
    %215 = vector.extract_strided_slice %214 {offsets = [0, 0], sizes = [1, 128], strides = [1, 1]} : vector<2x128xf32> to vector<1x128xf32>
    %216 = vector.broadcast %215 : vector<1x128xf32> to vector<8x128xf32>
    %217 = arith.mulf %212, %216 : vector<8x128xf32>
    %218 = vector.extract_strided_slice %214 {offsets = [1, 0], sizes = [1, 128], strides = [1, 1]} : vector<2x128xf32> to vector<1x128xf32>
    %219 = vector.broadcast %218 : vector<1x128xf32> to vector<8x128xf32>
    %220 = arith.addf %217, %219 : vector<8x128xf32>
    %cst_142 = arith.constant 0.000000e+00 : f32
    %221 = vector.broadcast %cst_142 : f32 to vector<8x128xf32>
    %222 = arith.maximumf %220, %221 : vector<8x128xf32>
    %c0_143 = arith.constant 0 : index
    %c0_144 = arith.constant 0 : index
    %223 = vector.load %arg6[%c0_143, %c0_144] : memref<64x128xf32, #tpu.memory_space<vmem>>, vector<8x128xf32>
    tpu.vector_store %arg6[%c0_143, %c0_144], %222 {strides = array<i32>} : memref<64x128xf32, #tpu.memory_space<vmem>>, vector<8x128xf32>,
    %c0_145 = arith.constant 0 : index
    %c0_146 = arith.constant 0 : index
    %224 = tpu.strided_load %arg6[%c0_145, %c0_146] {strides = array<i32: 2, 1>} : memref<64x128xf32, #tpu.memory_space<vmem>>, vector<4x128xf32>
    %c1_147 = arith.constant 1 : index
    %c0_148 = arith.constant 0 : index
    %225 = tpu.strided_load %arg6[%c1_147, %c0_148] {strides = array<i32: 2, 1>} : memref<64x128xf32, #tpu.memory_space<vmem>>, vector<4x128xf32>
    %226 = arith.maximumf %224, %225 : vector<4x128xf32>
    %c8_149 = arith.constant 8 : index
    %c0_150 = arith.constant 0 : index
    %227 = vector.load %arg5[%c8_149, %c0_150] : memref<80x128xf32, #tpu.memory_space<vmem>>, vector<4x128xf32>
    tpu.vector_store %arg5[%c8_149, %c0_150], %226 {strides = array<i32>} : memref<80x128xf32, #tpu.memory_space<vmem>>, vector<4x128xf32>,
    %228 = arith.truncf %226 : vector<4x128xf32> to vector<4x128xbf16>
    %c4 = arith.constant 4 : index
    %c1_151 = arith.constant 1 : index
    %c0_152 = arith.constant 0 : index
    %c0_153 = arith.constant 0 : index
    %229 = vector.load %arg2[%c4, %c1_151, %c0_152, %c0_153] : memref<5x3x128x128xbf16, #tpu.memory_space<vmem>>, vector<1x1x128x128xbf16>
    %230 = vector.shape_cast %229 : vector<1x1x128x128xbf16> to vector<128x128xbf16>
    %cst_154 = arith.constant dense<0.000000e+00> : vector<4x128xf32>
    %231 = tpu.matmul %228, %230, %cst_154 {dimension_numbers = #tpu.dot_dimension_numbers<[1], [0], [0], [1], [0, 0, 1, 1], [], []>} : vector<4x128xbf16>, vector<128x128xbf16>, vector<4x128xf32> -> vector<4x128xf32>
    %c7_155 = arith.constant 7 : index
    %c0_156 = arith.constant 0 : index
    %232 = vector.load %arg5[%c7_155, %c0_156] : memref<80x128xf32, #tpu.memory_space<vmem>>, vector<4x128xf32>
    %233 = arith.truncf %232 : vector<4x128xf32> to vector<4x128xbf16>
    %c4_157 = arith.constant 4 : index
    %c0_158 = arith.constant 0 : index
    %c0_159 = arith.constant 0 : index
    %c0_160 = arith.constant 0 : index
    %234 = vector.load %arg2[%c4_157, %c0_158, %c0_159, %c0_160] : memref<5x3x128x128xbf16, #tpu.memory_space<vmem>>, vector<1x1x128x128xbf16>
    %235 = vector.shape_cast %234 : vector<1x1x128x128xbf16> to vector<128x128xbf16>
    %cst_161 = arith.constant dense<0.000000e+00> : vector<4x128xf32>
    %236 = tpu.matmul %233, %235, %cst_161 {dimension_numbers = #tpu.dot_dimension_numbers<[1], [0], [0], [1], [0, 0, 1, 1], [], []>} : vector<4x128xbf16>, vector<128x128xbf16>, vector<4x128xf32> -> vector<4x128xf32>
    %c9_162 = arith.constant 9 : index
    %c0_163 = arith.constant 0 : index
    %237 = vector.load %arg5[%c9_162, %c0_163] : memref<80x128xf32, #tpu.memory_space<vmem>>, vector<4x128xf32>
    %238 = arith.truncf %237 : vector<4x128xf32> to vector<4x128xbf16>
    %c4_164 = arith.constant 4 : index
    %c2_165 = arith.constant 2 : index
    %c0_166 = arith.constant 0 : index
    %c0_167 = arith.constant 0 : index
    %239 = vector.load %arg2[%c4_164, %c2_165, %c0_166, %c0_167] : memref<5x3x128x128xbf16, #tpu.memory_space<vmem>>, vector<1x1x128x128xbf16>
    %240 = vector.shape_cast %239 : vector<1x1x128x128xbf16> to vector<128x128xbf16>
    %cst_168 = arith.constant dense<0.000000e+00> : vector<4x128xf32>
    %241 = tpu.matmul %238, %240, %cst_168 {dimension_numbers = #tpu.dot_dimension_numbers<[1], [0], [0], [1], [0, 0, 1, 1], [], []>} : vector<4x128xbf16>, vector<128x128xbf16>, vector<4x128xf32> -> vector<4x128xf32>
    %242 = tpu.iota {dimensions = array<i32: 0>} : vector<4x128xi32>
    %c4_i32 = arith.constant 4 : i32
    %c0_i32_169 = arith.constant 0 : i32
    %243 = arith.cmpi eq, %c4_i32, %c0_i32_169 : i32
    %c1_i32_170 = arith.constant 1 : i32
    %244 = arith.select %243, %c1_i32_170, %c4_i32 : i32
    %245 = vector.broadcast %244 : i32 to vector<4x128xi32>
    %246 = arith.remsi %242, %245 : vector<4x128xi32>
    %c0_i32_171 = arith.constant 0 : i32
    %247 = vector.broadcast %c0_i32_171 : i32 to vector<4x128xi32>
    %248 = arith.cmpi ne, %246, %247 : vector<4x128xi32>
    %c0_i32_172 = arith.constant 0 : i32
    %249 = vector.broadcast %c0_i32_172 : i32 to vector<4x128xi32>
    %250 = arith.cmpi slt, %246, %249 : vector<4x128xi32>
    %c0_i32_173 = arith.constant 0 : i32
    %251 = arith.cmpi slt, %244, %c0_i32_173 : i32
    %252 = vector.broadcast %251 : i1 to vector<4x128xi1>
    %253 = vector.broadcast %252 : vector<4x128xi1> to vector<4x128xi1>
    %254 = arith.xori %250, %253 : vector<4x128xi1>
    %255 = arith.andi %254, %248 : vector<4x128xi1>
    %256 = vector.broadcast %244 : i32 to vector<4x128xi32>
    %257 = arith.addi %246, %256 : vector<4x128xi32>
    %258 = arith.select %255, %257, %246 : vector<4x128xi1>, vector<4x128xi32>
    %c0_i32_174 = arith.constant 0 : i32
    %259 = vector.broadcast %c0_i32_174 : i32 to vector<4x128xi32>
    %260 = arith.cmpi eq, %258, %259 : vector<4x128xi32>
    %cst_175 = arith.constant 0.000000e+00 : f32
    %261 = vector.broadcast %cst_175 : f32 to vector<4x128xf32>
    %262 = arith.select %260, %261, %236 : vector<4x128xi1>, vector<4x128xf32>
    %263 = arith.addf %231, %262 : vector<4x128xf32>
    %c3_i32 = arith.constant 3 : i32
    %264 = vector.broadcast %c3_i32 : i32 to vector<4x128xi32>
    %265 = arith.cmpi eq, %258, %264 : vector<4x128xi32>
    %cst_176 = arith.constant 0.000000e+00 : f32
    %266 = vector.broadcast %cst_176 : f32 to vector<4x128xf32>
    %267 = arith.select %265, %266, %241 : vector<4x128xi1>, vector<4x128xf32>
    %268 = arith.addf %263, %267 : vector<4x128xf32>
    %c4_177 = arith.constant 4 : index
    %c0_178 = arith.constant 0 : index
    %c0_179 = arith.constant 0 : index
    %269 = vector.load %arg3[%c4_177, %c0_178, %c0_179] : memref<5x2x128xf32, #tpu.memory_space<vmem>>, vector<1x2x128xf32>
    %270 = vector.shape_cast %269 : vector<1x2x128xf32> to vector<2x128xf32>
    %271 = vector.extract_strided_slice %270 {offsets = [0, 0], sizes = [1, 128], strides = [1, 1]} : vector<2x128xf32> to vector<1x128xf32>
    %272 = vector.broadcast %271 : vector<1x128xf32> to vector<4x128xf32>
    %273 = arith.mulf %268, %272 : vector<4x128xf32>
    %274 = vector.extract_strided_slice %270 {offsets = [1, 0], sizes = [1, 128], strides = [1, 1]} : vector<2x128xf32> to vector<1x128xf32>
    %275 = vector.broadcast %274 : vector<1x128xf32> to vector<4x128xf32>
    %276 = arith.addf %273, %275 : vector<4x128xf32>
    %cst_180 = arith.constant 0.000000e+00 : f32
    %277 = vector.broadcast %cst_180 : f32 to vector<4x128xf32>
    %278 = arith.maximumf %276, %277 : vector<4x128xf32>
    %c0_181 = arith.constant 0 : index
    %c0_182 = arith.constant 0 : index
    %279 = vector.load %arg6[%c0_181, %c0_182] : memref<64x128xf32, #tpu.memory_space<vmem>>, vector<4x128xf32>
    tpu.vector_store %arg6[%c0_181, %c0_182], %278 {strides = array<i32>} : memref<64x128xf32, #tpu.memory_space<vmem>>, vector<4x128xf32>,
    %c0_183 = arith.constant 0 : index
    %c0_184 = arith.constant 0 : index
    %280 = tpu.strided_load %arg6[%c0_183, %c0_184] {strides = array<i32: 4, 1>} : memref<64x128xf32, #tpu.memory_space<vmem>>, vector<1x128xf32>
    %c1_185 = arith.constant 1 : index
    %c0_186 = arith.constant 0 : index
    %281 = tpu.strided_load %arg6[%c1_185, %c0_186] {strides = array<i32: 4, 1>} : memref<64x128xf32, #tpu.memory_space<vmem>>, vector<1x128xf32>
    %282 = arith.maximumf %280, %281 : vector<1x128xf32>
    %c2_187 = arith.constant 2 : index
    %c0_188 = arith.constant 0 : index
    %283 = tpu.strided_load %arg6[%c2_187, %c0_188] {strides = array<i32: 4, 1>} : memref<64x128xf32, #tpu.memory_space<vmem>>, vector<1x128xf32>
    %284 = arith.maximumf %282, %283 : vector<1x128xf32>
    %c3_189 = arith.constant 3 : index
    %c0_190 = arith.constant 0 : index
    %285 = tpu.strided_load %arg6[%c3_189, %c0_190] {strides = array<i32: 4, 1>} : memref<64x128xf32, #tpu.memory_space<vmem>>, vector<1x128xf32>
    %286 = arith.maximumf %284, %285 : vector<1x128xf32>
    %c0_191 = arith.constant 0 : index
    %c0_192 = arith.constant 0 : index
    %c0_193 = arith.constant 0 : index
    %287 = vector.load %arg4[%c0_191, %c0_192, %c0_193] : memref<1x1x128xf32, #tpu.memory_space<vmem>>, vector<1x1x128xf32>
    %288 = vector.shape_cast %287 : vector<1x1x128xf32> to vector<1x128xf32>
    %289 = vector.shape_cast %286 : vector<1x128xf32> to vector<1x1x128xf32>
    tpu.vector_store %arg4[%c0_191, %c0_192, %c0_193], %289 {strides = array<i32>} : memref<1x1x128xf32, #tpu.memory_space<vmem>>, vector<1x1x128xf32>,
    return
  }
  func.func @transform_0(%arg0: i32) -> (i32, i32, i32) {
    %c0_i32 = arith.constant 0 : i32
    %c0_i32_0 = arith.constant 0 : i32
    %c0_i32_1 = arith.constant 0 : i32
    return %arg0, %c0_i32, %c0_i32_0 : i32, i32, i32
  }
  func.func @transform_1(%arg0: i32) -> (i32, i32, i32, i32) {
    %c0_i32 = arith.constant 0 : i32
    %c0_i32_0 = arith.constant 0 : i32
    %c0_i32_1 = arith.constant 0 : i32
    %c0_i32_2 = arith.constant 0 : i32
    %c0_i32_3 = arith.constant 0 : i32
    return %c0_i32, %c0_i32_0, %c0_i32_1, %c0_i32_2 : i32, i32, i32, i32
  }
  func.func @transform_2(%arg0: i32) -> (i32, i32, i32) {
    %c0_i32 = arith.constant 0 : i32
    %c0_i32_0 = arith.constant 0 : i32
    %c0_i32_1 = arith.constant 0 : i32
    %c0_i32_2 = arith.constant 0 : i32
    return %c0_i32, %c0_i32_0, %c0_i32_1 : i32, i32, i32
  }
  func.func @transform_3(%arg0: i32) -> (i32, i32, i32) {
    %c0_i32 = arith.constant 0 : i32
    %c0_i32_0 = arith.constant 0 : i32
    %c0_i32_1 = arith.constant 0 : i32
    return %arg0, %c0_i32, %c0_i32_0 : i32, i32, i32
  }
}

</mosaic_0001>

<llo_original>
// kernel: tpu_custom_call.1
$region0: #{tpu_custom_call.1}
  #allocation0 [shape = 'u32[]', space=smem, size = 0x4, offset = 0x4, fixed_abs, tag = 'smem constant byte address 0x4 - core index']
  #allocation1 [shape = 'u32[144,128]{1,0:T(1,128)}', space=vmem, size = 0x12000, scoped, tag = 'internal scratch']
  #allocation2 [shape = 'f32[80,128]{1,0:T(8,128)}', space=vmem, size = 0xa000, scoped, tag = 'scratch operand']
  #allocation3 [shape = 'f32[64,128]{1,0:T(8,128)}', space=vmem, size = 0x8000, scoped, tag = 'scratch operand']
  %s0 = inlined_call_operand.hbm [shape: bf16[2,64,128], index: 0, kind: input, shape index: {}]
  %s1 = inlined_call_operand.hbm [shape: bf16[5,3,128,128], index: 1, kind: input, shape index: {}]
  %s2 = inlined_call_operand.hbm [shape: f32[5,2,128], index: 2, kind: input, shape index: {}]
  %s3 = inlined_call_operand.hbm [shape: f32[2,1,128], index: 3, kind: output, shape index: {}]
  %s4 = sld [smem:[#allocation0]]
  $region57: #{tpu_custom_call.1} parent=0
    _
  %s6 = ssub.s32 1, %s4
  %s7 = scalar_select 0, %s6, %s4
  $region1: #{tpu_custom_call.1} parent=0
    #allocation4 [shape = 'u8[32768]{0}', space=vmem, size = 0x8000, scoped, tag = 'input window, operand 0']
    #allocation5 [shape = 's32[2]{0}', space=sflag, size = 0x8, scoped, tag = 'scoped memory for tpu_custom_call.1']
    #allocation6 [shape = 's32[2]{0}', space=sflag, size = 0x8, scoped, tag = 'scoped memory for tpu_custom_call.1']
    #allocation7 [shape = 'u8[491520]{0}', space=vmem, size = 0x78000, scoped, tag = 'input window, operand 1, single buffered']
    #allocation8 [shape = 's32[1]{0}', space=sflag, size = 0x4, scoped, tag = 'scoped memory for tpu_custom_call.1']
    #allocation9 [shape = 'u8[5120]{0}', space=vmem, size = 0x1400, scoped, tag = 'input window, operand 2, single buffered']
    #allocation10 [shape = 'u8[1024]{0}', space=vmem, size = 0x400, scoped, tag = 'output window, operand 0']
    %8 = vsyncpa [#allocation5], 0
    %s9 = scalar_lea.sflag [#allocation5], 1
    %10 = vsyncpa %s9, 0
    %11 = vsyncpa [#allocation8], 0
    %12 = vsyncpa [#allocation6], 0
    %s13 = scalar_lea.sflag [#allocation6], 1
    %14 = vsyncpa %s13, 0
    loop: start=0, step=1, limit=4
    $region2: #{tpu_custom_call.1} parent=1 // loop_pre_header
      _
    $region3: #{tpu_custom_call.1} parent=1 // loop_header
      %s16 = sphi 0, %s20
      %p17 = scmp.ge.s32.totalorder %s16, 4
      %s26 = sphi 0, %s28
      %s29 = sphi 0, %s26
      %s30 = sphi 0, %s29
      %s46 = sphi 0, %s30
      %s50 = sphi 0, %s50
      %s52 = sphi 0, %s50
      %s53 = sphi 0, %s52
      %s67 = sphi 0, %s53
      %s71 = sphi 0, %s71
      %s73 = sphi 0, %s71
      %s74 = sphi 0, %s73
      %s88 = sphi 0, %s74
      %s94 = sphi 0, %s96
      %s97 = sphi 0, %s94
      %s98 = sphi 0, %s97
      %s114 = sphi 0, %s98
    $region4: #{tpu_custom_call.1} parent=1 // loop_header_branch
      %19 = sbr.rel (%p17) target = $region8
    $region5: #{tpu_custom_call.1} parent=1 // loop_body
      %s21 = ssub.s32 %s16, 1
      %s22 = ssub.s32 %s16, 2
      %s23 = sadd.s32 %s16, 1
      %s24 = ssub.s32 %s16, %s23
      %p25 = scmp.eq.s32.totalorder %s24, 0
      %s27 = sadd.s32 %s26, 1
      %s28 = scalar_select %p25, %s26, %s27
      %p31 = pneg %p25
      %p32 = scmp.eq.s32.totalorder %s16, 1
      %p33 = por %p31, %p32
      %p34 = scmp.ne.s32.totalorder %s26, %s29
      %p35 = scmp.eq.s32.totalorder %s16, 0
      %p36 = por %p34, %p35
      %p37 = scmp.ne.s32.totalorder %s26, %s29
      %p38 = scmp.eq.s32.totalorder %s21, 1
      %p39 = por %p37, %p38
      %p40 = scmp.ne.s32.totalorder %s29, %s30
      %p41 = scmp.eq.s32.totalorder %s21, 0
      %p42 = por %p40, %p41
      %p43 = scmp.ne.s32.totalorder %s29, %s30
      %p44 = scmp.eq.s32.totalorder %s22, 1
      %p45 = por %p43, %p44
      %p47 = scmp.ne.s32.totalorder %s30, %s46
      %p48 = scmp.eq.s32.totalorder %s22, 0
      %p49 = por %p47, %p48
      %s51 = sadd.s32 %s50, 1
      %p54 = scmp.eq.s32.totalorder %s16, 1
      %p55 = scmp.ne.s32.totalorder %s50, %s52
      %p56 = scmp.eq.s32.totalorder %s16, 0
      %p57 = por %p55, %p56
      %p58 = scmp.ne.s32.totalorder %s50, %s52
      %p59 = scmp.eq.s32.totalorder %s21, 1
      %p60 = por %p58, %p59
      %p61 = scmp.ne.s32.totalorder %s52, %s53
      %p62 = scmp.eq.s32.totalorder %s21, 0
      %p63 = por %p61, %p62
      %p64 = scmp.ne.s32.totalorder %s52, %s53
      %p65 = scmp.eq.s32.totalorder %s22, 1
      %p66 = por %p64, %p65
      %p68 = scmp.ne.s32.totalorder %s53, %s67
      %p69 = scmp.eq.s32.totalorder %s22, 0
      %p70 = por %p68, %p69
      %s72 = sadd.s32 %s71, 1
      %p75 = scmp.eq.s32.totalorder %s16, 1
      %p76 = scmp.ne.s32.totalorder %s71, %s73
      %p77 = scmp.eq.s32.totalorder %s16, 0
      %p78 = por %p76, %p77
      %p79 = scmp.ne.s32.totalorder %s71, %s73
      %p80 = scmp.eq.s32.totalorder %s21, 1
      %p81 = por %p79, %p80
      %p82 = scmp.ne.s32.totalorder %s73, %s74
      %p83 = scmp.eq.s32.totalorder %s21, 0
      %p84 = por %p82, %p83
      %p85 = scmp.ne.s32.totalorder %s73, %s74
      %p86 = scmp.eq.s32.totalorder %s22, 1
      %p87 = por %p85, %p86
      %p89 = scmp.ne.s32.totalorder %s74, %s88
      %p90 = scmp.eq.s32.totalorder %s22, 0
      %p91 = por %p89, %p90
      %s92 = ssub.s32 %s16, %s23
      %p93 = scmp.eq.s32.totalorder %s92, 0
      %s95 = sadd.s32 %s94, 1
      %s96 = scalar_select %p93, %s94, %s95
      %p99 = pneg %p93
      %p100 = scmp.eq.s32.totalorder %s16, 1
      %p101 = por %p99, %p100
      %p102 = scmp.ne.s32.totalorder %s94, %s97
      %p103 = scmp.eq.s32.totalorder %s16, 0
      %p104 = por %p102, %p103
      %p105 = scmp.ne.s32.totalorder %s94, %s97
      %p106 = scmp.eq.s32.totalorder %s21, 1
      %p107 = por %p105, %p106
      %p108 = scmp.ne.s32.totalorder %s97, %s98
      %p109 = scmp.eq.s32.totalorder %s21, 0
      %p110 = por %p108, %p109
      %p111 = scmp.ne.s32.totalorder %s97, %s98
      %p112 = scmp.eq.s32.totalorder %s22, 1
      %p113 = por %p111, %p112
      %p115 = scmp.ne.s32.totalorder %s98, %s114
      %p116 = scmp.eq.s32.totalorder %s22, 0
      %p117 = por %p115, %p116
      %p118 = scmp.le.s32.totalorder 1, %s16
      %p119 = scmp.lt.s32.totalorder %s16, 3
      %p120 = pnand %p118, %p119
      %p121 = pneg %p120
      // Predicated region
      $region9: #{tpu_custom_call.1} parent=5 // pred_check
        _
      $region10: #{tpu_custom_call.1} parent=5 // pred_check_branch
        %123 = sbr.rel (%p120) target = $region12
      $region11: #{tpu_custom_call.1} parent=5 // pred_region
        %s124 = ssub.s32 %s16, 1
        // Predicated region
        $region13: #{tpu_custom_call.1} parent=11 // pred_check
          %p125 = pneg %p63
        $region14: #{tpu_custom_call.1} parent=11 // pred_check_branch
          %127 = sbr.rel (%p125) target = $region16
        $region15: #{tpu_custom_call.1} parent=11 // pred_region
          %s129 = ssub.s32 15360, 15360
          %130 = vsyncadd [#allocation8], %s129
          %s131 = sshll.u32 [#allocation7], 4
          %s132 = int_to_ptr.vmem [resolvable:$true] %s131
          %137 = dma.hbm_to_vmem [thread:$0]  %s1, 15360, %s132, [#allocation8], 64, 64, 4
        $region16: #{tpu_custom_call.1} parent=11 // pred_fallthru
          _
        // Predicated region
        $region17: #{tpu_custom_call.1} parent=11 // pred_check
          %p138 = pneg %p84
        $region18: #{tpu_custom_call.1} parent=11 // pred_check_branch
          %140 = sbr.rel (%p138) target = $region20
        $region19: #{tpu_custom_call.1} parent=11 // pred_region
          %s142 = ssub.s32 160, 160
          %143 = vsyncadd [#allocation8], %s142
          %s144 = sshll.u32 [#allocation9], 4
          %s145 = int_to_ptr.vmem [resolvable:$true] %s144
          %150 = dma.hbm_to_vmem [thread:$0]  %s2, 160, %s145, [#allocation8], 32, 32, 2
        $region20: #{tpu_custom_call.1} parent=11 // pred_fallthru
          _
      $region12: #{tpu_custom_call.1} parent=5 // pred_fallthru
        _
      %p151 = scmp.lt.s32.totalorder %s16, 2
      // Predicated region
      $region21: #{tpu_custom_call.1} parent=5 // pred_check
        %p152 = pneg %p151
      $region22: #{tpu_custom_call.1} parent=5 // pred_check_branch
        %154 = sbr.rel (%p152) target = $region24
      $region23: #{tpu_custom_call.1} parent=5 // pred_region
        // Predicated region
        $region25: #{tpu_custom_call.1} parent=23 // pred_check
          %p155 = pneg %p36
        $region26: #{tpu_custom_call.1} parent=23 // pred_check_branch
          %157 = sbr.rel (%p155) target = $region28
        $region27: #{tpu_custom_call.1} parent=23 // pred_region
          %s158 = sand.u32 %s26, 1
          %s159 = scalar_lea.sflag [#allocation5], %s158
          %s160 = sand.u32 %s26, 1
          %s161 = smul.addr %s160, 32
          %s162 = scalar_lea.vmem [#allocation4], %s161
          %s164 = ssub.s32 512, 512
          %165 = vsyncadd %s159, %s164
          %s166 = smul.addr %s16, 8
          %s167 = smul.addr %s166, 64
          %s168 = scalar_lea.hbm %s0, %s167
          %s169 = sshll.u32 %s162, 4
          %s170 = int_to_ptr.vmem [resolvable:$true] %s169
          %175 = dma.hbm_to_vmem [thread:$0]  %s168, 512, %s170, %s159, 64, 64, 4
        $region28: #{tpu_custom_call.1} parent=23 // pred_fallthru
          _
      $region24: #{tpu_custom_call.1} parent=5 // pred_fallthru
        _
      %p176 = scmp.le.s32.totalorder 1, %s16
      %p177 = scmp.lt.s32.totalorder %s16, 3
      %p178 = pnand %p176, %p177
      %p179 = pneg %p178
      // Predicated region
      $region29: #{tpu_custom_call.1} parent=5 // pred_check
        _
      $region30: #{tpu_custom_call.1} parent=5 // pred_check_branch
        %181 = sbr.rel (%p178) target = $region32
      $region31: #{tpu_custom_call.1} parent=5 // pred_region
        %s182 = ssub.s32 %s16, 1
        %s183 = sand.u32 %s29, 1
        %s184 = scalar_lea.sflag [#allocation5], %s183
        %s185 = sand.u32 %s29, 1
        %s186 = smul.addr %s185, 32
        %s187 = scalar_lea.vmem [#allocation4], %s186
        // Predicated region
        $region33: #{tpu_custom_call.1} parent=31 // pred_check
          %p188 = pneg %p42
        $region34: #{tpu_custom_call.1} parent=31 // pred_check_branch
          %190 = sbr.rel (%p188) target = $region36
        $region35: #{tpu_custom_call.1} parent=31 // pred_region
          %191 = dma.done %s184, 512
        $region36: #{tpu_custom_call.1} parent=31 // pred_fallthru
          _
        // Predicated region
        $region37: #{tpu_custom_call.1} parent=31 // pred_check
          %p192 = pneg %p63
        $region38: #{tpu_custom_call.1} parent=31 // pred_check_branch
          %194 = sbr.rel (%p192) target = $region40
        $region39: #{tpu_custom_call.1} parent=31 // pred_region
          %195 = dma.done [#allocation8], 15360
        $region40: #{tpu_custom_call.1} parent=31 // pred_fallthru
          _
        // Predicated region
        $region41: #{tpu_custom_call.1} parent=31 // pred_check
          %p196 = pneg %p84
        $region42: #{tpu_custom_call.1} parent=31 // pred_check_branch
          %198 = sbr.rel (%p196) target = $region44
        $region43: #{tpu_custom_call.1} parent=31 // pred_region
          %199 = dma.done [#allocation8], 160
        $region44: #{tpu_custom_call.1} parent=31 // pred_fallthru
          _
        %s200 = sand.u32 %s29, 1
        %s201 = scalar_lea.sflag [#allocation5], %s200
        %s202 = sand.u32 %s29, 1
        %s203 = smul.addr %s202, 32
        %s204 = scalar_lea.vmem [#allocation4], %s203
        %p205 = pneg %p42
        %p206 = pneg %p39
        %p207 = pneg %p63
        %p208 = pneg %p60
        %p209 = pneg %p84
        %p210 = pneg %p81
        %p211 = pneg %p110
        %p212 = pneg %p107
        %s213 = sand.u32 %s97, 1
        %s214 = scalar_lea.sflag [#allocation6], %s213
        %s215 = sand.u32 %s97, 1
        %s216 = scalar_lea.vmem [#allocation10], %s215
        %v218 = vld [vmem:[%s187] sm:$0xf]
        %v219 = vld [vmem:[%s187 + $0x4] sm:$0xf]
        %v220 = vld [vmem:[%s187 + $0x8] sm:$0xf]
        %v221 = vld [vmem:[%s187 + $0xc] sm:$0xf]
        %v222 = vld [vmem:[%s187 + $0x10] sm:$0xf]
        %v223 = vld [vmem:[%s187 + $0x14] sm:$0xf]
        %v224 = vld [vmem:[%s187 + $0x18] sm:$0xf]
        %v225 = vld [vmem:[%s187 + $0x1c] sm:$0xf]
        %v226 = vunpack.c.l.bf16 %v218
        %v227 = vunpack.c.l.bf16 %v219
        %v228 = vunpack.c.l.bf16 %v220
        %v229 = vunpack.c.l.bf16 %v221
        %v230 = vunpack.c.l.bf16 %v222
        %v231 = vunpack.c.l.bf16 %v223
        %v232 = vunpack.c.l.bf16 %v224
        %v233 = vunpack.c.l.bf16 %v225
        %234 = vst [vmem:[#allocation2 + $0x8] sm:$0xff] %v226
        %235 = vst [vmem:[#allocation2 + $0x10] sm:$0xff] %v227
        %236 = vst [vmem:[#allocation2 + $0x18] sm:$0xff] %v228
        %237 = vst [vmem:[#allocation2 + $0x20] sm:$0xff] %v229
        %238 = vst [vmem:[#allocation2 + $0x28] sm:$0xff] %v230
        %239 = vst [vmem:[#allocation2 + $0x30] sm:$0xff] %v231
        %240 = vst [vmem:[#allocation2 + $0x38] sm:$0xff] %v232
        %241 = vst [vmem:[#allocation2 + $0x40] sm:$0xff] %v233
        %s242 = scalar_lea.vmem [#allocation7], 64
        %v243 = vld [vmem:[%s242] sm:$0xf]
        %v244 = vld [vmem:[%s242 + $0x4] sm:$0xf]
        %v245 = vld [vmem:[%s242 + $0x8] sm:$0xf]
        %v246 = vld [vmem:[%s242 + $0xc] sm:$0xf]
        %v247 = vld [vmem:[%s242 + $0x10] sm:$0xf]
        %v248 = vld [vmem:[%s242 + $0x14] sm:$0xf]
        %v249 = vld [vmem:[%s242 + $0x18] sm:$0xf]
        %v250 = vld [vmem:[%s242 + $0x1c] sm:$0xf]
        %v251 = vld [vmem:[%s242 + $0x20] sm:$0xf]
        %v252 = vld [vmem:[%s242 + $0x24] sm:$0xf]
        %v253 = vld [vmem:[%s242 + $0x28] sm:$0xf]
        %v254 = vld [vmem:[%s242 + $0x2c] sm:$0xf]
        %v255 = vld [vmem:[%s242 + $0x30] sm:$0xf]
        %v256 = vld [vmem:[%s242 + $0x34] sm:$0xf]
        %v257 = vld [vmem:[%s242 + $0x38] sm:$0xf]
        %v258 = vld [vmem:[%s242 + $0x3c] sm:$0xf]
        %v259 = vld [vmem:[#allocation2 + $0x7] sm:$0xff]
        %v260 = vld [vmem:[#allocation2 + $0xf] sm:$0xff]
        %v261 = vld [vmem:[#allocation2 + $0x17] sm:$0xff]
        %v262 = vld [vmem:[#allocation2 + $0x1f] sm:$0xff]
        %v263 = vld [vmem:[#allocation2 + $0x27] sm:$0xff]
        %v264 = vld [vmem:[#allocation2 + $0x2f] sm:$0xff]
        %v265 = vld [vmem:[#allocation2 + $0x37] sm:$0xff]
        %v266 = vld [vmem:[#allocation2 + $0x3f] sm:$0xff]
        %v267 = vpack.c.bf16 %v260, %v259
        %v268 = vpack.c.bf16 %v262, %v261
        %v269 = vpack.c.bf16 %v264, %v263
        %v270 = vpack.c.bf16 %v266, %v265
        %v271 = vld [vmem:[#allocation7] sm:$0xf]
        %v272 = vld [vmem:[#allocation7 + $0x4] sm:$0xf]
        %v273 = vld [vmem:[#allocation7 + $0x8] sm:$0xf]
        %v274 = vld [vmem:[#allocation7 + $0xc] sm:$0xf]
        %v275 = vld [vmem:[#allocation7 + $0x10] sm:$0xf]
        %v276 = vld [vmem:[#allocation7 + $0x14] sm:$0xf]
        %v277 = vld [vmem:[#allocation7 + $0x18] sm:$0xf]
        %v278 = vld [vmem:[#allocation7 + $0x1c] sm:$0xf]
        %v279 = vld [vmem:[#allocation7 + $0x20] sm:$0xf]
        %v280 = vld [vmem:[#allocation7 + $0x24] sm:$0xf]
        %v281 = vld [vmem:[#allocation7 + $0x28] sm:$0xf]
        %v282 = vld [vmem:[#allocation7 + $0x2c] sm:$0xf]
        %v283 = vld [vmem:[#allocation7 + $0x30] sm:$0xf]
        %v284 = vld [vmem:[#allocation7 + $0x34] sm:$0xf]
        %v285 = vld [vmem:[#allocation7 + $0x38] sm:$0xf]
        %v286 = vld [vmem:[#allocation7 + $0x3c] sm:$0xf]
        %v303 = vunpack.c.l.b16 %v271
        %v304 = vunpack.c.l.b16 %v272
        %v305 = vunpack.c.l.b16 %v273
        %v306 = vunpack.c.l.b16 %v274
        %v307 = vunpack.c.l.b16 %v275
        %v308 = vunpack.c.l.b16 %v276
        %v309 = vunpack.c.l.b16 %v277
        %v310 = vunpack.c.l.b16 %v278
        %v311 = vunpack.c.l.b16 %v279
        %v312 = vunpack.c.l.b16 %v280
        %v313 = vunpack.c.l.b16 %v281
        %v314 = vunpack.c.l.b16 %v282
        %v315 = vunpack.c.l.b16 %v283
        %v316 = vunpack.c.l.b16 %v284
        %v317 = vunpack.c.l.b16 %v285
        %v318 = vunpack.c.l.b16 %v286
        %v319 = vpack.c.b16 %v304, %v303
        %v320 = vpack.c.b16 %v306, %v305
        %v321 = vpack.c.b16 %v308, %v307
        %v322 = vpack.c.b16 %v310, %v309
        %v323 = vpack.c.b16 %v312, %v311
        %v324 = vpack.c.b16 %v314, %v313
        %v325 = vpack.c.b16 %v316, %v315
        %v326 = vpack.c.b16 %v318, %v317
        %335 = vmatprep.subr.bf16.mxu0 0
        %336 = vmatpush1.bf16.msra.mxu0 %v319
        %337 = vmatprep.subr.bf16.mxu0 0
        %338 = vmatpush1.bf16.msra.mxu0 %v320
        %339 = vmatprep.subr.bf16.mxu0 0
        %340 = vmatpush1.bf16.msra.mxu0 %v321
        %341 = vmatprep.subr.bf16.mxu0 0
        %342 = vmatpush1.bf16.msra.mxu0 %v322
        %343 = vmatprep.subr.bf16.mxu0 0
        %344 = vmatpush1.bf16.msra.mxu0 %v323
        %345 = vmatprep.subr.bf16.mxu0 0
        %346 = vmatpush1.bf16.msra.mxu0 %v324
        %347 = vmatprep.subr.bf16.mxu0 0
        %348 = vmatpush1.bf16.msra.mxu0 %v325
        %349 = vmatprep.subr.bf16.mxu0 0
        %350 = vmatpush1.bf16.msra.mxu0 %v326
        %351 = vmatprep.subr.bf16.mxu0 0
        %352 = vmatpush1.bf16.msra.mxu0 0
        %353 = vmatprep.subr.bf16.mxu0 0
        %354 = vmatpush1.bf16.msra.mxu0 0
        %355 = vmatprep.subr.bf16.mxu0 0
        %356 = vmatpush1.bf16.msra.mxu0 0
        %357 = vmatprep.subr.bf16.mxu0 0
        %358 = vmatpush1.bf16.msra.mxu0 0
        %359 = vmatprep.subr.bf16.mxu0 0
        %360 = vmatpush1.bf16.msra.mxu0 0
        %361 = vmatprep.subr.bf16.mxu0 0
        %362 = vmatpush1.bf16.msra.mxu0 0
        %363 = vmatprep.subr.bf16.mxu0 0
        %364 = vmatpush1.bf16.msra.mxu0 0
        %365 = vmatprep.subr.bf16.mxu0 0
        %366 = vmatpush1.bf16.msra.mxu0 0
        %367 = vmatprep.mubr.bf16.mxu0 0
        %368 = vmatmul.mubr.bf16.gmra.mrb[0].mxu0 %v267
        %v369 = vpop.f32.mrb[0].mxu0
        %v370 = vadd.f32 0.0, %v369
        %v371 = vpop.f32.mrb[0].mxu0
        %v372 = vpop.f32.mrb[0].mxu0
        %v373 = vadd.f32 0.0, %v372
        %v374 = vpop.f32.mrb[0].mxu0
        %375 = vmatprep.mubr.bf16.mxu0 0
        %376 = vmatmul.mubr.bf16.gmra.mrb[0].mxu0 %v268
        %v377 = vpop.f32.mrb[0].mxu0
        %v378 = vadd.f32 0.0, %v377
        %v379 = vpop.f32.mrb[0].mxu0
        %v380 = vpop.f32.mrb[0].mxu0
        %v381 = vadd.f32 0.0, %v380
        %v382 = vpop.f32.mrb[0].mxu0
        %383 = vmatprep.mubr.bf16.mxu0 0
        %384 = vmatmul.mubr.bf16.gmra.mrb[0].mxu0 %v269
        %v385 = vpop.f32.mrb[0].mxu0
        %v386 = vadd.f32 0.0, %v385
        %v387 = vpop.f32.mrb[0].mxu0
        %v388 = vpop.f32.mrb[0].mxu0
        %v389 = vadd.f32 0.0, %v388
        %v390 = vpop.f32.mrb[0].mxu0
        %391 = vmatprep.mubr.bf16.mxu0 0
        %392 = vmatmul.mubr.bf16.gmra.mrb[0].mxu0 %v270
        %v393 = vpop.f32.mrb[0].mxu0
        %v394 = vadd.f32 0.0, %v393
        %v395 = vpop.f32.mrb[0].mxu0
        %v396 = vpop.f32.mrb[0].mxu0
        %v397 = vadd.f32 0.0, %v396
        %v398 = vpop.f32.mrb[0].mxu0
        %399 = vdwg.mxu0
        %v400 = vld [vmem:[#allocation2 + $0x9] sm:$0xff]
        %v401 = vld [vmem:[#allocation2 + $0x11] sm:$0xff]
        %v402 = vld [vmem:[#allocation2 + $0x19] sm:$0xff]
        %v403 = vld [vmem:[#allocation2 + $0x21] sm:$0xff]
        %v404 = vld [vmem:[#allocation2 + $0x29] sm:$0xff]
        %v405 = vld [vmem:[#allocation2 + $0x31] sm:$0xff]
        %v406 = vld [vmem:[#allocation2 + $0x39] sm:$0xff]
        %v407 = vld [vmem:[#allocation2 + $0x41] sm:$0xff]
        %v408 = vpack.c.bf16 %v401, %v400
        %v409 = vpack.c.bf16 %v403, %v402
        %v410 = vpack.c.bf16 %v405, %v404
        %v411 = vpack.c.bf16 %v407, %v406
        %s412 = scalar_lea.vmem [#allocation7], 128
        %v413 = vld [vmem:[%s412] sm:$0xf]
        %v414 = vld [vmem:[%s412 + $0x4] sm:$0xf]
        %v415 = vld [vmem:[%s412 + $0x8] sm:$0xf]
        %v416 = vld [vmem:[%s412 + $0xc] sm:$0xf]
        %v417 = vld [vmem:[%s412 + $0x10] sm:$0xf]
        %v418 = vld [vmem:[%s412 + $0x14] sm:$0xf]
        %v419 = vld [vmem:[%s412 + $0x18] sm:$0xf]
        %v420 = vld [vmem:[%s412 + $0x1c] sm:$0xf]
        %v421 = vld [vmem:[%s412 + $0x20] sm:$0xf]
        %v422 = vld [vmem:[%s412 + $0x24] sm:$0xf]
        %v423 = vld [vmem:[%s412 + $0x28] sm:$0xf]
        %v424 = vld [vmem:[%s412 + $0x2c] sm:$0xf]
        %v425 = vld [vmem:[%s412 + $0x30] sm:$0xf]
        %v426 = vld [vmem:[%s412 + $0x34] sm:$0xf]
        %v427 = vld [vmem:[%s412 + $0x38] sm:$0xf]
        %v428 = vld [vmem:[%s412 + $0x3c] sm:$0xf]
        %v445 = vunpack.c.l.b16 %v413
        %v446 = vunpack.c.l.b16 %v414
        %v447 = vunpack.c.l.b16 %v415
        %v448 = vunpack.c.l.b16 %v416
        %v449 = vunpack.c.l.b16 %v417
        %v450 = vunpack.c.l.b16 %v418
        %v451 = vunpack.c.l.b16 %v419
        %v452 = vunpack.c.l.b16 %v420
        %v453 = vunpack.c.l.b16 %v421
        %v454 = vunpack.c.l.b16 %v422
        %v455 = vunpack.c.l.b16 %v423
        %v456 = vunpack.c.l.b16 %v424
        %v457 = vunpack.c.l.b16 %v425
        %v458 = vunpack.c.l.b16 %v426
        %v459 = vunpack.c.l.b16 %v427
        %v460 = vunpack.c.l.b16 %v428
        %v461 = vpack.c.b16 %v446, %v445
        %v462 = vpack.c.b16 %v448, %v447
        %v463 = vpack.c.b16 %v450, %v449
        %v464 = vpack.c.b16 %v452, %v451
        %v465 = vpack.c.b16 %v454, %v453
        %v466 = vpack.c.b16 %v456, %v455
        %v467 = vpack.c.b16 %v458, %v457
        %v468 = vpack.c.b16 %v460, %v459
        %477 = vmatprep.subr.bf16.mxu0 0
        %478 = vmatpush1.bf16.msra.mxu0 %v461
        %479 = vmatprep.subr.bf16.mxu0 0
        %480 = vmatpush1.bf16.msra.mxu0 %v462
        %481 = vmatprep.subr.bf16.mxu0 0
        %482 = vmatpush1.bf16.msra.mxu0 %v463
        %483 = vmatprep.subr.bf16.mxu0 0
        %484 = vmatpush1.bf16.msra.mxu0 %v464
        %485 = vmatprep.subr.bf16.mxu0 0
        %486 = vmatpush1.bf16.msra.mxu0 %v465
        %487 = vmatprep.subr.bf16.mxu0 0
        %488 = vmatpush1.bf16.msra.mxu0 %v466
        %489 = vmatprep.subr.bf16.mxu0 0
        %490 = vmatpush1.bf16.msra.mxu0 %v467
        %491 = vmatprep.subr.bf16.mxu0 0
        %492 = vmatpush1.bf16.msra.mxu0 %v468
        %493 = vmatprep.subr.bf16.mxu0 0
        %494 = vmatpush1.bf16.msra.mxu0 0
        %495 = vmatprep.subr.bf16.mxu0 0
        %496 = vmatpush1.bf16.msra.mxu0 0
        %497 = vmatprep.subr.bf16.mxu0 0
        %498 = vmatpush1.bf16.msra.mxu0 0
        %499 = vmatprep.subr.bf16.mxu0 0
        %500 = vmatpush1.bf16.msra.mxu0 0
        %501 = vmatprep.subr.bf16.mxu0 0
        %502 = vmatpush1.bf16.msra.mxu0 0
        %503 = vmatprep.subr.bf16.mxu0 0
        %504 = vmatpush1.bf16.msra.mxu0 0
        %505 = vmatprep.subr.bf16.mxu0 0
        %506 = vmatpush1.bf16.msra.mxu0 0
        %507 = vmatprep.subr.bf16.mxu0 0
        %508 = vmatpush1.bf16.msra.mxu0 0
        %509 = vmatprep.mubr.bf16.mxu0 0
        %510 = vmatmul.mubr.bf16.gmra.mrb[0].mxu0 %v408
        %v511 = vpop.f32.mrb[0].mxu0
        %v512 = vadd.f32 0.0, %v511
        %v513 = vpop.f32.mrb[0].mxu0
        %v514 = vpop.f32.mrb[0].mxu0
        %v515 = vadd.f32 0.0, %v514
        %v516 = vpop.f32.mrb[0].mxu0
        %517 = vmatprep.mubr.bf16.mxu0 0
        %518 = vmatmul.mubr.bf16.gmra.mrb[0].mxu0 %v409
        %v519 = vpop.f32.mrb[0].mxu0
        %v520 = vadd.f32 0.0, %v519
        %v521 = vpop.f32.mrb[0].mxu0
        %v522 = vpop.f32.mrb[0].mxu0
        %v523 = vadd.f32 0.0, %v522
        %v524 = vpop.f32.mrb[0].mxu0
        %525 = vmatprep.mubr.bf16.mxu0 0
        %526 = vmatmul.mubr.bf16.gmra.mrb[0].mxu0 %v410
        %v527 = vpop.f32.mrb[0].mxu0
        %v528 = vadd.f32 0.0, %v527
        %v529 = vpop.f32.mrb[0].mxu0
        %v530 = vpop.f32.mrb[0].mxu0
        %v531 = vadd.f32 0.0, %v530
        %v532 = vpop.f32.mrb[0].mxu0
        %533 = vmatprep.mubr.bf16.mxu0 0
        %534 = vmatmul.mubr.bf16.gmra.mrb[0].mxu0 %v411
        %v535 = vpop.f32.mrb[0].mxu0
        %v536 = vadd.f32 0.0, %v535
        %v537 = vpop.f32.mrb[0].mxu0
        %v538 = vpop.f32.mrb[0].mxu0
        %v539 = vadd.f32 0.0, %v538
        %v540 = vpop.f32.mrb[0].mxu0
        %541 = vdwg.mxu0
        %v542 = vlaneseq
        %v543 = vshrl.u32 %v542, 7
        %v544 = vadd.s32 %v543, 8
        %v545 = vadd.s32 %v543, 16
        %v546 = vadd.s32 %v543, 24
        %v547 = vadd.s32 %v543, 32
        %v548 = vadd.s32 %v543, 40
        %v549 = vadd.s32 %v543, 48
        %v550 = vadd.s32 %v543, 56
        %vm551 = vcmp.lt.s32.totalorder %v543, 0
        %v552 = vsub.s32 0, %v543
        %v553 = vsel %vm551, %v552, %v543
        %v554 = vshrl.u32 %v553, 6
        %v555 = vand.u32 %v553, 63
        %v556 = vsub.s32 0, %v555
        %v557 = vsel %vm551, %v556, %v555
        %vm558 = vcmp.lt.s32.totalorder %v544, 0
        %v559 = vsub.s32 0, %v544
        %v560 = vsel %vm558, %v559, %v544
        %v561 = vshrl.u32 %v560, 6
        %v562 = vand.u32 %v560, 63
        %v563 = vsub.s32 0, %v562
        %v564 = vsel %vm558, %v563, %v562
        %vm565 = vcmp.lt.s32.totalorder %v545, 0
        %v566 = vsub.s32 0, %v545
        %v567 = vsel %vm565, %v566, %v545
        %v568 = vshrl.u32 %v567, 6
        %v569 = vand.u32 %v567, 63
        %v570 = vsub.s32 0, %v569
        %v571 = vsel %vm565, %v570, %v569
        %vm572 = vcmp.lt.s32.totalorder %v546, 0
        %v573 = vsub.s32 0, %v546
        %v574 = vsel %vm572, %v573, %v546
        %v575 = vshrl.u32 %v574, 6
        %v576 = vand.u32 %v574, 63
        %v577 = vsub.s32 0, %v576
        %v578 = vsel %vm572, %v577, %v576
        %vm579 = vcmp.lt.s32.totalorder %v547, 0
        %v580 = vsub.s32 0, %v547
        %v581 = vsel %vm579, %v580, %v547
        %v582 = vshrl.u32 %v581, 6
        %v583 = vand.u32 %v581, 63
        %v584 = vsub.s32 0, %v583
        %v585 = vsel %vm579, %v584, %v583
        %vm586 = vcmp.lt.s32.totalorder %v548, 0
        %v587 = vsub.s32 0, %v548
        %v588 = vsel %vm586, %v587, %v548
        %v589 = vshrl.u32 %v588, 6
        %v590 = vand.u32 %v588, 63
        %v591 = vsub.s32 0, %v590
        %v592 = vsel %vm586, %v591, %v590
        %vm593 = vcmp.lt.s32.totalorder %v549, 0
        %v594 = vsub.s32 0, %v549
        %v595 = vsel %vm593, %v594, %v549
        %v596 = vshrl.u32 %v595, 6
        %v597 = vand.u32 %v595, 63
        %v598 = vsub.s32 0, %v597
        %v599 = vsel %vm593, %v598, %v597
        %vm600 = vcmp.lt.s32.totalorder %v550, 0
        %v601 = vsub.s32 0, %v550
        %v602 = vsel %vm600, %v601, %v550
        %v603 = vshrl.u32 %v602, 6
        %v604 = vand.u32 %v602, 63
        %v605 = vsub.s32 0, %v604
        %v606 = vsel %vm600, %v605, %v604
        %vm607 = vcmp.ne.s32.totalorder %v557, 0
        %vm608 = vcmp.ne.s32.totalorder %v564, 0
        %vm609 = vcmp.ne.s32.totalorder %v571, 0
        %vm610 = vcmp.ne.s32.totalorder %v578, 0
        %vm611 = vcmp.ne.s32.totalorder %v585, 0
        %vm612 = vcmp.ne.s32.totalorder %v592, 0
        %vm613 = vcmp.ne.s32.totalorder %v599, 0
        %vm614 = vcmp.ne.s32.totalorder %v606, 0
        %vm615 = vcmp.lt.s32.totalorder %v557, 0
        %vm616 = vcmp.lt.s32.totalorder %v564, 0
        %vm617 = vcmp.lt.s32.totalorder %v571, 0
        %vm618 = vcmp.lt.s32.totalorder %v578, 0
        %vm619 = vcmp.lt.s32.totalorder %v585, 0
        %vm620 = vcmp.lt.s32.totalorder %v592, 0
        %vm621 = vcmp.lt.s32.totalorder %v599, 0
        %vm622 = vcmp.lt.s32.totalorder %v606, 0
        %vm623 = vmand %vm615, %vm607
        %vm624 = vmand %vm616, %vm608
        %vm625 = vmand %vm617, %vm609
        %vm626 = vmand %vm618, %vm610
        %vm627 = vmand %vm619, %vm611
        %vm628 = vmand %vm620, %vm612
        %vm629 = vmand %vm621, %vm613
        %vm630 = vmand %vm622, %vm614
        %v631 = vadd.s32 %v557, 64
        %v632 = vadd.s32 %v564, 64
        %v633 = vadd.s32 %v571, 64
        %v634 = vadd.s32 %v578, 64
        %v635 = vadd.s32 %v585, 64
        %v636 = vadd.s32 %v592, 64
        %v637 = vadd.s32 %v599, 64
        %v638 = vadd.s32 %v606, 64
        %v639 = vsel %vm623, %v631, %v557
        %v640 = vsel %vm624, %v632, %v564
        %v641 = vsel %vm625, %v633, %v571
        %v642 = vsel %vm626, %v634, %v578
        %v643 = vsel %vm627, %v635, %v585
        %v644 = vsel %vm628, %v636, %v592
        %v645 = vsel %vm629, %v637, %v599
        %v646 = vsel %vm630, %v638, %v606
        %vm647 = vcmp.eq.s32.totalorder %v639, 0
        %vm648 = vcmp.eq.s32.totalorder %v640, 0
        %vm649 = vcmp.eq.s32.totalorder %v641, 0
        %vm650 = vcmp.eq.s32.totalorder %v642, 0
        %vm651 = vcmp.eq.s32.totalorder %v643, 0
        %vm652 = vcmp.eq.s32.totalorder %v644, 0
        %vm653 = vcmp.eq.s32.totalorder %v645, 0
        %vm654 = vcmp.eq.s32.totalorder %v646, 0
        %v655 = vsel %vm647, 0.0, %v370
        %v656 = vsel %vm648, 0.0, %v373
        %v657 = vsel %vm649, 0.0, %v378
        %v658 = vsel %vm650, 0.0, %v381
        %v659 = vsel %vm651, 0.0, %v386
        %v660 = vsel %vm652, 0.0, %v389
        %v661 = vsel %vm653, 0.0, %v394
        %v662 = vsel %vm654, 0.0, %v397
        %v671 = vunpack.c.l.b16 %v218
        %v672 = vunpack.c.l.b16 %v219
        %v673 = vunpack.c.l.b16 %v220
        %v674 = vunpack.c.l.b16 %v221
        %v675 = vunpack.c.l.b16 %v222
        %v676 = vunpack.c.l.b16 %v223
        %v677 = vunpack.c.l.b16 %v224
        %v678 = vunpack.c.l.b16 %v225
        %v679 = vpack.c.b16 %v672, %v671
        %v680 = vpack.c.b16 %v674, %v673
        %v681 = vpack.c.b16 %v676, %v675
        %v682 = vpack.c.b16 %v678, %v677
        %v703 = vunpack.c.l.b16 %v243
        %v704 = vunpack.c.l.b16 %v244
        %v705 = vunpack.c.l.b16 %v245
        %v706 = vunpack.c.l.b16 %v246
        %v707 = vunpack.c.l.b16 %v247
        %v708 = vunpack.c.l.b16 %v248
        %v709 = vunpack.c.l.b16 %v249
        %v710 = vunpack.c.l.b16 %v250
        %v711 = vunpack.c.l.b16 %v251
        %v712 = vunpack.c.l.b16 %v252
        %v713 = vunpack.c.l.b16 %v253
        %v714 = vunpack.c.l.b16 %v254
        %v715 = vunpack.c.l.b16 %v255
        %v716 = vunpack.c.l.b16 %v256
        %v717 = vunpack.c.l.b16 %v257
        %v718 = vunpack.c.l.b16 %v258
        %v719 = vpack.c.b16 %v704, %v703
        %v720 = vpack.c.b16 %v706, %v705
        %v721 = vpack.c.b16 %v708, %v707
        %v722 = vpack.c.b16 %v710, %v709
        %v723 = vpack.c.b16 %v712, %v711
        %v724 = vpack.c.b16 %v714, %v713
        %v725 = vpack.c.b16 %v716, %v715
        %v726 = vpack.c.b16 %v718, %v717
        %735 = vmatprep.subr.bf16.mxu0 0
        %736 = vmatpush1.bf16.msra.mxu0 %v719
        %737 = vmatprep.subr.bf16.mxu0 0
        %738 = vmatpush1.bf16.msra.mxu0 %v720
        %739 = vmatprep.subr.bf16.mxu0 0
        %740 = vmatpush1.bf16.msra.mxu0 %v721
        %741 = vmatprep.subr.bf16.mxu0 0
        %742 = vmatpush1.bf16.msra.mxu0 %v722
        %743 = vmatprep.subr.bf16.mxu0 0
        %744 = vmatpush1.bf16.msra.mxu0 %v723
        %745 = vmatprep.subr.bf16.mxu0 0
        %746 = vmatpush1.bf16.msra.mxu0 %v724
        %747 = vmatprep.subr.bf16.mxu0 0
        %748 = vmatpush1.bf16.msra.mxu0 %v725
        %749 = vmatprep.subr.bf16.mxu0 0
        %750 = vmatpush1.bf16.msra.mxu0 %v726
        %751 = vmatprep.subr.bf16.mxu0 0
        %752 = vmatpush1.bf16.msra.mxu0 0
        %753 = vmatprep.subr.bf16.mxu0 0
        %754 = vmatpush1.bf16.msra.mxu0 0
        %755 = vmatprep.subr.bf16.mxu0 0
        %756 = vmatpush1.bf16.msra.mxu0 0
        %757 = vmatprep.subr.bf16.mxu0 0
        %758 = vmatpush1.bf16.msra.mxu0 0
        %759 = vmatprep.subr.bf16.mxu0 0
        %760 = vmatpush1.bf16.msra.mxu0 0
        %761 = vmatprep.subr.bf16.mxu0 0
        %762 = vmatpush1.bf16.msra.mxu0 0
        %763 = vmatprep.subr.bf16.mxu0 0
        %764 = vmatpush1.bf16.msra.mxu0 0
        %765 = vmatprep.subr.bf16.mxu0 0
        %766 = vmatpush1.bf16.msra.mxu0 0
        %767 = vmatprep.mubr.bf16.mxu0 0
        %768 = vmatmul.mubr.bf16.gmra.mrb[0].mxu0 %v679
        %v769 = vpop.f32.mrb[0].mxu0
        %v770 = vadd.f32 %v655, %v769
        %v771 = vpop.f32.mrb[0].mxu0
        %v772 = vpop.f32.mrb[0].mxu0
        %v773 = vadd.f32 %v656, %v772
        %v774 = vpop.f32.mrb[0].mxu0
        %775 = vmatprep.mubr.bf16.mxu0 0
        %776 = vmatmul.mubr.bf16.gmra.mrb[0].mxu0 %v680
        %v777 = vpop.f32.mrb[0].mxu0
        %v778 = vadd.f32 %v657, %v777
        %v779 = vpop.f32.mrb[0].mxu0
        %v780 = vpop.f32.mrb[0].mxu0
        %v781 = vadd.f32 %v658, %v780
        %v782 = vpop.f32.mrb[0].mxu0
        %783 = vmatprep.mubr.bf16.mxu0 0
        %784 = vmatmul.mubr.bf16.gmra.mrb[0].mxu0 %v681
        %v785 = vpop.f32.mrb[0].mxu0
        %v786 = vadd.f32 %v659, %v785
        %v787 = vpop.f32.mrb[0].mxu0
        %v788 = vpop.f32.mrb[0].mxu0
        %v789 = vadd.f32 %v660, %v788
        %v790 = vpop.f32.mrb[0].mxu0
        %791 = vmatprep.mubr.bf16.mxu0 0
        %792 = vmatmul.mubr.bf16.gmra.mrb[0].mxu0 %v682
        %v793 = vpop.f32.mrb[0].mxu0
        %v794 = vadd.f32 %v661, %v793
        %v795 = vpop.f32.mrb[0].mxu0
        %v796 = vpop.f32.mrb[0].mxu0
        %v797 = vadd.f32 %v662, %v796
        %v798 = vpop.f32.mrb[0].mxu0
        %799 = vdwg.mxu0
        %vm800 = vcmp.eq.s32.totalorder %v639, 63
        %vm801 = vcmp.eq.s32.totalorder %v640, 63
        %vm802 = vcmp.eq.s32.totalorder %v641, 63
        %vm803 = vcmp.eq.s32.totalorder %v642, 63
        %vm804 = vcmp.eq.s32.totalorder %v643, 63
        %vm805 = vcmp.eq.s32.totalorder %v644, 63
        %vm806 = vcmp.eq.s32.totalorder %v645, 63
        %vm807 = vcmp.eq.s32.totalorder %v646, 63
        %v808 = vsel %vm800, 0.0, %v512
        %v809 = vsel %vm801, 0.0, %v515
        %v810 = vsel %vm802, 0.0, %v520
        %v811 = vsel %vm803, 0.0, %v523
        %v812 = vsel %vm804, 0.0, %v528
        %v813 = vsel %vm805, 0.0, %v531
        %v814 = vsel %vm806, 0.0, %v536
        %v815 = vsel %vm807, 0.0, %v539
        %v816 = vadd.f32 %v770, %v808
        %v817 = vadd.f32 %v773, %v809
        %v818 = vadd.f32 %v778, %v810
        %v819 = vadd.f32 %v781, %v811
        %v820 = vadd.f32 %v786, %v812
        %v821 = vadd.f32 %v789, %v813
        %v822 = vadd.f32 %v794, %v814
        %v823 = vadd.f32 %v797, %v815
        %v824 = vld [vmem:[#allocation9] sm:$0x3]
        %v825 = vlaneseq
        %v826 = vshrl.u32 %v825, 7
        %v827 = vsub.s32 0, %v826
        %v828 = vrot.slane %v824, %v827
        %v829 = vmul.f32 %v816, %v828
        %v830 = vmul.f32 %v817, %v828
        %v831 = vmul.f32 %v818, %v828
        %v832 = vmul.f32 %v819, %v828
        %v833 = vmul.f32 %v820, %v828
        %v834 = vmul.f32 %v821, %v828
        %v835 = vmul.f32 %v822, %v828
        %v836 = vmul.f32 %v823, %v828
        %v837 = vlaneseq
        %v838 = vshrl.u32 %v837, 7
        %v839 = vsub.s32 1, %v838
        %v840 = vrot.slane %v824, %v839
        %v841 = vadd.f32 %v829, %v840
        %v842 = vadd.f32 %v830, %v840
        %v843 = vadd.f32 %v831, %v840
        %v844 = vadd.f32 %v832, %v840
        %v845 = vadd.f32 %v833, %v840
        %v846 = vadd.f32 %v834, %v840
        %v847 = vadd.f32 %v835, %v840
        %v848 = vadd.f32 %v836, %v840
        %v849 = vmax.f32 %v841, 0.0
        %v850 = vmax.f32 %v842, 0.0
        %v851 = vmax.f32 %v843, 0.0
        %v852 = vmax.f32 %v844, 0.0
        %v853 = vmax.f32 %v845, 0.0
        %v854 = vmax.f32 %v846, 0.0
        %v855 = vmax.f32 %v847, 0.0
        %v856 = vmax.f32 %v848, 0.0
        %857 = vst [vmem:[#allocation3] sm:$0xff] %v849
        %858 = vst [vmem:[#allocation3 + $0x8] sm:$0xff] %v850
        %859 = vst [vmem:[#allocation3 + $0x10] sm:$0xff] %v851
        %860 = vst [vmem:[#allocation3 + $0x18] sm:$0xff] %v852
        %861 = vst [vmem:[#allocation3 + $0x20] sm:$0xff] %v853
        %862 = vst [vmem:[#allocation3 + $0x28] sm:$0xff] %v854
        %863 = vst [vmem:[#allocation3 + $0x30] sm:$0xff] %v855
        %864 = vst [vmem:[#allocation3 + $0x38] sm:$0xff] %v856
        %v865 = vld [vmem:[#allocation3] ss:$2 sm:$0xff]
        %s866 = scalar_lea.vmem [#allocation3], 16
        %v867 = vld [vmem:[%s866] ss:$2 sm:$0xff]
        %s868 = scalar_lea.vmem [#allocation3], 32
        %v869 = vld [vmem:[%s868] ss:$2 sm:$0xff]
        %s870 = scalar_lea.vmem [#allocation3], 48
        %v871 = vld [vmem:[%s870] ss:$2 sm:$0xff]
        %s872 = scalar_lea.vmem [#allocation3], 1
        %v873 = vld [vmem:[%s872] ss:$2 sm:$0xff]
        %s874 = scalar_lea.vmem [#allocation3], 17
        %v875 = vld [vmem:[%s874] ss:$2 sm:$0xff]
        %s876 = scalar_lea.vmem [#allocation3], 33
        %v877 = vld [vmem:[%s876] ss:$2 sm:$0xff]
        %s878 = scalar_lea.vmem [#allocation3], 49
        %v879 = vld [vmem:[%s878] ss:$2 sm:$0xff]
        %v880 = vmax.f32 %v865, %v873
        %v881 = vmax.f32 %v867, %v875
        %v882 = vmax.f32 %v869, %v877
        %v883 = vmax.f32 %v871, %v879
        %884 = vst [vmem:[#allocation2 + $0x8] sm:$0xff] %v880
        %885 = vst [vmem:[#allocation2 + $0x10] sm:$0xff] %v881
        %886 = vst [vmem:[#allocation2 + $0x18] sm:$0xff] %v882
        %887 = vst [vmem:[#allocation2 + $0x20] sm:$0xff] %v883
        %v888 = vpack.c.bf16 %v881, %v880
        %v889 = vpack.c.bf16 %v883, %v882
        %s890 = scalar_lea.vmem [#allocation7], 256
        %v891 = vld [vmem:[%s890] sm:$0xf]
        %v892 = vld [vmem:[%s890 + $0x4] sm:$0xf]
        %v893 = vld [vmem:[%s890 + $0x8] sm:$0xf]
        %v894 = vld [vmem:[%s890 + $0xc] sm:$0xf]
        %v895 = vld [vmem:[%s890 + $0x10] sm:$0xf]
        %v896 = vld [vmem:[%s890 + $0x14] sm:$0xf]
        %v897 = vld [vmem:[%s890 + $0x18] sm:$0xf]
        %v898 = vld [vmem:[%s890 + $0x1c] sm:$0xf]
        %v899 = vld [vmem:[%s890 + $0x20] sm:$0xf]
        %v900 = vld [vmem:[%s890 + $0x24] sm:$0xf]
        %v901 = vld [vmem:[%s890 + $0x28] sm:$0xf]
        %v902 = vld [vmem:[%s890 + $0x2c] sm:$0xf]
        %v903 = vld [vmem:[%s890 + $0x30] sm:$0xf]
        %v904 = vld [vmem:[%s890 + $0x34] sm:$0xf]
        %v905 = vld [vmem:[%s890 + $0x38] sm:$0xf]
        %v906 = vld [vmem:[%s890 + $0x3c] sm:$0xf]
        %v907 = vld [vmem:[#allocation2 + $0x7] sm:$0xff]
        %v908 = vld [vmem:[#allocation2 + $0xf] sm:$0xff]
        %v909 = vld [vmem:[#allocation2 + $0x17] sm:$0xff]
        %v910 = vld [vmem:[#allocation2 + $0x1f] sm:$0xff]
        %v911 = vpack.c.bf16 %v908, %v907
        %v912 = vpack.c.bf16 %v910, %v909
        %s913 = scalar_lea.vmem [#allocation7], 192
        %v914 = vld [vmem:[%s913] sm:$0xf]
        %v915 = vld [vmem:[%s913 + $0x4] sm:$0xf]
        %v916 = vld [vmem:[%s913 + $0x8] sm:$0xf]
        %v917 = vld [vmem:[%s913 + $0xc] sm:$0xf]
        %v918 = vld [vmem:[%s913 + $0x10] sm:$0xf]
        %v919 = vld [vmem:[%s913 + $0x14] sm:$0xf]
        %v920 = vld [vmem:[%s913 + $0x18] sm:$0xf]
        %v921 = vld [vmem:[%s913 + $0x1c] sm:$0xf]
        %v922 = vld [vmem:[%s913 + $0x20] sm:$0xf]
        %v923 = vld [vmem:[%s913 + $0x24] sm:$0xf]
        %v924 = vld [vmem:[%s913 + $0x28] sm:$0xf]
        %v925 = vld [vmem:[%s913 + $0x2c] sm:$0xf]
        %v926 = vld [vmem:[%s913 + $0x30] sm:$0xf]
        %v927 = vld [vmem:[%s913 + $0x34] sm:$0xf]
        %v928 = vld [vmem:[%s913 + $0x38] sm:$0xf]
        %v929 = vld [vmem:[%s913 + $0x3c] sm:$0xf]
        %v946 = vunpack.c.l.b16 %v914
        %v947 = vunpack.c.l.b16 %v915
        %v948 = vunpack.c.l.b16 %v916
        %v949 = vunpack.c.l.b16 %v917
        %v950 = vunpack.c.l.b16 %v918
        %v951 = vunpack.c.l.b16 %v919
        %v952 = vunpack.c.l.b16 %v920
        %v953 = vunpack.c.l.b16 %v921
        %v954 = vunpack.c.l.b16 %v922
        %v955 = vunpack.c.l.b16 %v923
        %v956 = vunpack.c.l.b16 %v924
        %v957 = vunpack.c.l.b16 %v925
        %v958 = vunpack.c.l.b16 %v926
        %v959 = vunpack.c.l.b16 %v927
        %v960 = vunpack.c.l.b16 %v928
        %v961 = vunpack.c.l.b16 %v929
        %v962 = vpack.c.b16 %v947, %v946
        %v963 = vpack.c.b16 %v949, %v948
        %v964 = vpack.c.b16 %v951, %v950
        %v965 = vpack.c.b16 %v953, %v952
        %v966 = vpack.c.b16 %v955, %v954
        %v967 = vpack.c.b16 %v957, %v956
        %v968 = vpack.c.b16 %v959, %v958
        %v969 = vpack.c.b16 %v961, %v960
        %978 = vmatprep.subr.bf16.mxu0 0
        %979 = vmatpush1.bf16.msra.mxu0 %v962
        %980 = vmatprep.subr.bf16.mxu0 0
        %981 = vmatpush1.bf16.msra.mxu0 %v963
        %982 = vmatprep.subr.bf16.mxu0 0
        %983 = vmatpush1.bf16.msra.mxu0 %v964
        %984 = vmatprep.subr.bf16.mxu0 0
        %985 = vmatpush1.bf16.msra.mxu0 %v965
        %986 = vmatprep.subr.bf16.mxu0 0
        %987 = vmatpush1.bf16.msra.mxu0 %v966
        %988 = vmatprep.subr.bf16.mxu0 0
        %989 = vmatpush1.bf16.msra.mxu0 %v967
        %990 = vmatprep.subr.bf16.mxu0 0
        %991 = vmatpush1.bf16.msra.mxu0 %v968
        %992 = vmatprep.subr.bf16.mxu0 0
        %993 = vmatpush1.bf16.msra.mxu0 %v969
        %994 = vmatprep.subr.bf16.mxu0 0
        %995 = vmatpush1.bf16.msra.mxu0 0
        %996 = vmatprep.subr.bf16.mxu0 0
        %997 = vmatpush1.bf16.msra.mxu0 0
        %998 = vmatprep.subr.bf16.mxu0 0
        %999 = vmatpush1.bf16.msra.mxu0 0
        %1000 = vmatprep.subr.bf16.mxu0 0
        %1001 = vmatpush1.bf16.msra.mxu0 0
        %1002 = vmatprep.subr.bf16.mxu0 0
        %1003 = vmatpush1.bf16.msra.mxu0 0
        %1004 = vmatprep.subr.bf16.mxu0 0
        %1005 = vmatpush1.bf16.msra.mxu0 0
        %1006 = vmatprep.subr.bf16.mxu0 0
        %1007 = vmatpush1.bf16.msra.mxu0 0
        %1008 = vmatprep.subr.bf16.mxu0 0
        %1009 = vmatpush1.bf16.msra.mxu0 0
        %1010 = vmatprep.mubr.bf16.mxu0 0
        %1011 = vmatmul.mubr.bf16.gmra.mrb[0].mxu0 %v911
        %v1012 = vpop.f32.mrb[0].mxu0
        %v1013 = vadd.f32 0.0, %v1012
        %v1014 = vpop.f32.mrb[0].mxu0
        %v1015 = vpop.f32.mrb[0].mxu0
        %v1016 = vadd.f32 0.0, %v1015
        %v1017 = vpop.f32.mrb[0].mxu0
        %1018 = vmatprep.mubr.bf16.mxu0 0
        %1019 = vmatmul.mubr.bf16.gmra.mrb[0].mxu0 %v912
        %v1020 = vpop.f32.mrb[0].mxu0
        %v1021 = vadd.f32 0.0, %v1020
        %v1022 = vpop.f32.mrb[0].mxu0
        %v1023 = vpop.f32.mrb[0].mxu0
        %v1024 = vadd.f32 0.0, %v1023
        %v1025 = vpop.f32.mrb[0].mxu0
        %1026 = vdwg.mxu0
        %v1027 = vld [vmem:[#allocation2 + $0x9] sm:$0xff]
        %v1028 = vld [vmem:[#allocation2 + $0x11] sm:$0xff]
        %v1029 = vld [vmem:[#allocation2 + $0x19] sm:$0xff]
        %v1030 = vld [vmem:[#allocation2 + $0x21] sm:$0xff]
        %v1031 = vpack.c.bf16 %v1028, %v1027
        %v1032 = vpack.c.bf16 %v1030, %v1029
        %s1033 = scalar_lea.vmem [#allocation7], 320
        %v1034 = vld [vmem:[%s1033] sm:$0xf]
        %v1035 = vld [vmem:[%s1033 + $0x4] sm:$0xf]
        %v1036 = vld [vmem:[%s1033 + $0x8] sm:$0xf]
        %v1037 = vld [vmem:[%s1033 + $0xc] sm:$0xf]
        %v1038 = vld [vmem:[%s1033 + $0x10] sm:$0xf]
        %v1039 = vld [vmem:[%s1033 + $0x14] sm:$0xf]
        %v1040 = vld [vmem:[%s1033 + $0x18] sm:$0xf]
        %v1041 = vld [vmem:[%s1033 + $0x1c] sm:$0xf]
        %v1042 = vld [vmem:[%s1033 + $0x20] sm:$0xf]
        %v1043 = vld [vmem:[%s1033 + $0x24] sm:$0xf]
        %v1044 = vld [vmem:[%s1033 + $0x28] sm:$0xf]
        %v1045 = vld [vmem:[%s1033 + $0x2c] sm:$0xf]
        %v1046 = vld [vmem:[%s1033 + $0x30] sm:$0xf]
        %v1047 = vld [vmem:[%s1033 + $0x34] sm:$0xf]
        %v1048 = vld [vmem:[%s1033 + $0x38] sm:$0xf]
        %v1049 = vld [vmem:[%s1033 + $0x3c] sm:$0xf]
        %v1066 = vunpack.c.l.b16 %v1034
        %v1067 = vunpack.c.l.b16 %v1035
        %v1068 = vunpack.c.l.b16 %v1036
        %v1069 = vunpack.c.l.b16 %v1037
        %v1070 = vunpack.c.l.b16 %v1038
        %v1071 = vunpack.c.l.b16 %v1039
        %v1072 = vunpack.c.l.b16 %v1040
        %v1073 = vunpack.c.l.b16 %v1041
        %v1074 = vunpack.c.l.b16 %v1042
        %v1075 = vunpack.c.l.b16 %v1043
        %v1076 = vunpack.c.l.b16 %v1044
        %v1077 = vunpack.c.l.b16 %v1045
        %v1078 = vunpack.c.l.b16 %v1046
        %v1079 = vunpack.c.l.b16 %v1047
        %v1080 = vunpack.c.l.b16 %v1048
        %v1081 = vunpack.c.l.b16 %v1049
        %v1082 = vpack.c.b16 %v1067, %v1066
        %v1083 = vpack.c.b16 %v1069, %v1068
        %v1084 = vpack.c.b16 %v1071, %v1070
        %v1085 = vpack.c.b16 %v1073, %v1072
        %v1086 = vpack.c.b16 %v1075, %v1074
        %v1087 = vpack.c.b16 %v1077, %v1076
        %v1088 = vpack.c.b16 %v1079, %v1078
        %v1089 = vpack.c.b16 %v1081, %v1080
        %1098 = vmatprep.subr.bf16.mxu0 0
        %1099 = vmatpush1.bf16.msra.mxu0 %v1082
        %1100 = vmatprep.subr.bf16.mxu0 0
        %1101 = vmatpush1.bf16.msra.mxu0 %v1083
        %1102 = vmatprep.subr.bf16.mxu0 0
        %1103 = vmatpush1.bf16.msra.mxu0 %v1084
        %1104 = vmatprep.subr.bf16.mxu0 0
        %1105 = vmatpush1.bf16.msra.mxu0 %v1085
        %1106 = vmatprep.subr.bf16.mxu0 0
        %1107 = vmatpush1.bf16.msra.mxu0 %v1086
        %1108 = vmatprep.subr.bf16.mxu0 0
        %1109 = vmatpush1.bf16.msra.mxu0 %v1087
        %1110 = vmatprep.subr.bf16.mxu0 0
        %1111 = vmatpush1.bf16.msra.mxu0 %v1088
        %1112 = vmatprep.subr.bf16.mxu0 0
        %1113 = vmatpush1.bf16.msra.mxu0 %v1089
        %1114 = vmatprep.subr.bf16.mxu0 0
        %1115 = vmatpush1.bf16.msra.mxu0 0
        %1116 = vmatprep.subr.bf16.mxu0 0
        %1117 = vmatpush1.bf16.msra.mxu0 0
        %1118 = vmatprep.subr.bf16.mxu0 0
        %1119 = vmatpush1.bf16.msra.mxu0 0
        %1120 = vmatprep.subr.bf16.mxu0 0
        %1121 = vmatpush1.bf16.msra.mxu0 0
        %1122 = vmatprep.subr.bf16.mxu0 0
        %1123 = vmatpush1.bf16.msra.mxu0 0
        %1124 = vmatprep.subr.bf16.mxu0 0
        %1125 = vmatpush1.bf16.msra.mxu0 0
        %1126 = vmatprep.subr.bf16.mxu0 0
        %1127 = vmatpush1.bf16.msra.mxu0 0
        %1128 = vmatprep.subr.bf16.mxu0 0
        %1129 = vmatpush1.bf16.msra.mxu0 0
        %1130 = vmatprep.mubr.bf16.mxu0 0
        %1131 = vmatmul.mubr.bf16.gmra.mrb[0].mxu0 %v1031
        %v1132 = vpop.f32.mrb[0].mxu0
        %v1133 = vadd.f32 0.0, %v1132
        %v1134 = vpop.f32.mrb[0].mxu0
        %v1135 = vpop.f32.mrb[0].mxu0
        %v1136 = vadd.f32 0.0, %v1135
        %v1137 = vpop.f32.mrb[0].mxu0
        %1138 = vmatprep.mubr.bf16.mxu0 0
        %1139 = vmatmul.mubr.bf16.gmra.mrb[0].mxu0 %v1032
        %v1140 = vpop.f32.mrb[0].mxu0
        %v1141 = vadd.f32 0.0, %v1140
        %v1142 = vpop.f32.mrb[0].mxu0
        %v1143 = vpop.f32.mrb[0].mxu0
        %v1144 = vadd.f32 0.0, %v1143
        %v1145 = vpop.f32.mrb[0].mxu0
        %1146 = vdwg.mxu0
        %vm1147 = vcmp.lt.s32.totalorder %v543, 0
        %v1148 = vsub.s32 0, %v543
        %v1149 = vsel %vm1147, %v1148, %v543
        %v1150 = vshrl.u32 %v1149, 5
        %v1151 = vand.u32 %v1149, 31
        %v1152 = vsub.s32 0, %v1151
        %v1153 = vsel %vm1147, %v1152, %v1151
        %vm1154 = vcmp.lt.s32.totalorder %v544, 0
        %v1155 = vsub.s32 0, %v544
        %v1156 = vsel %vm1154, %v1155, %v544
        %v1157 = vshrl.u32 %v1156, 5
        %v1158 = vand.u32 %v1156, 31
        %v1159 = vsub.s32 0, %v1158
        %v1160 = vsel %vm1154, %v1159, %v1158
        %vm1161 = vcmp.lt.s32.totalorder %v545, 0
        %v1162 = vsub.s32 0, %v545
        %v1163 = vsel %vm1161, %v1162, %v545
        %v1164 = vshrl.u32 %v1163, 5
        %v1165 = vand.u32 %v1163, 31
        %v1166 = vsub.s32 0, %v1165
        %v1167 = vsel %vm1161, %v1166, %v1165
        %vm1168 = vcmp.lt.s32.totalorder %v546, 0
        %v1169 = vsub.s32 0, %v546
        %v1170 = vsel %vm1168, %v1169, %v546
        %v1171 = vshrl.u32 %v1170, 5
        %v1172 = vand.u32 %v1170, 31
        %v1173 = vsub.s32 0, %v1172
        %v1174 = vsel %vm1168, %v1173, %v1172
        %vm1175 = vcmp.ne.s32.totalorder %v1153, 0
        %vm1176 = vcmp.ne.s32.totalorder %v1160, 0
        %vm1177 = vcmp.ne.s32.totalorder %v1167, 0
        %vm1178 = vcmp.ne.s32.totalorder %v1174, 0
        %vm1179 = vcmp.lt.s32.totalorder %v1153, 0
        %vm1180 = vcmp.lt.s32.totalorder %v1160, 0
        %vm1181 = vcmp.lt.s32.totalorder %v1167, 0
        %vm1182 = vcmp.lt.s32.totalorder %v1174, 0
        %vm1183 = vmand %vm1179, %vm1175
        %vm1184 = vmand %vm1180, %vm1176
        %vm1185 = vmand %vm1181, %vm1177
        %vm1186 = vmand %vm1182, %vm1178
        %v1187 = vadd.s32 %v1153, 32
        %v1188 = vadd.s32 %v1160, 32
        %v1189 = vadd.s32 %v1167, 32
        %v1190 = vadd.s32 %v1174, 32
        %v1191 = vsel %vm1183, %v1187, %v1153
        %v1192 = vsel %vm1184, %v1188, %v1160
        %v1193 = vsel %vm1185, %v1189, %v1167
        %v1194 = vsel %vm1186, %v1190, %v1174
        %vm1195 = vcmp.eq.s32.totalorder %v1191, 0
        %vm1196 = vcmp.eq.s32.totalorder %v1192, 0
        %vm1197 = vcmp.eq.s32.totalorder %v1193, 0
        %vm1198 = vcmp.eq.s32.totalorder %v1194, 0
        %v1199 = vsel %vm1195, 0.0, %v1013
        %v1200 = vsel %vm1196, 0.0, %v1016
        %v1201 = vsel %vm1197, 0.0, %v1021
        %v1202 = vsel %vm1198, 0.0, %v1024
        %v1219 = vunpack.c.l.b16 %v891
        %v1220 = vunpack.c.l.b16 %v892
        %v1221 = vunpack.c.l.b16 %v893
        %v1222 = vunpack.c.l.b16 %v894
        %v1223 = vunpack.c.l.b16 %v895
        %v1224 = vunpack.c.l.b16 %v896
        %v1225 = vunpack.c.l.b16 %v897
        %v1226 = vunpack.c.l.b16 %v898
        %v1227 = vunpack.c.l.b16 %v899
        %v1228 = vunpack.c.l.b16 %v900
        %v1229 = vunpack.c.l.b16 %v901
        %v1230 = vunpack.c.l.b16 %v902
        %v1231 = vunpack.c.l.b16 %v903
        %v1232 = vunpack.c.l.b16 %v904
        %v1233 = vunpack.c.l.b16 %v905
        %v1234 = vunpack.c.l.b16 %v906
        %v1235 = vpack.c.b16 %v1220, %v1219
        %v1236 = vpack.c.b16 %v1222, %v1221
        %v1237 = vpack.c.b16 %v1224, %v1223
        %v1238 = vpack.c.b16 %v1226, %v1225
        %v1239 = vpack.c.b16 %v1228, %v1227
        %v1240 = vpack.c.b16 %v1230, %v1229
        %v1241 = vpack.c.b16 %v1232, %v1231
        %v1242 = vpack.c.b16 %v1234, %v1233
        %1251 = vmatprep.subr.bf16.mxu0 0
        %1252 = vmatpush1.bf16.msra.mxu0 %v1235
        %1253 = vmatprep.subr.bf16.mxu0 0
        %1254 = vmatpush1.bf16.msra.mxu0 %v1236
        %1255 = vmatprep.subr.bf16.mxu0 0
        %1256 = vmatpush1.bf16.msra.mxu0 %v1237
        %1257 = vmatprep.subr.bf16.mxu0 0
        %1258 = vmatpush1.bf16.msra.mxu0 %v1238
        %1259 = vmatprep.subr.bf16.mxu0 0
        %1260 = vmatpush1.bf16.msra.mxu0 %v1239
        %1261 = vmatprep.subr.bf16.mxu0 0
        %1262 = vmatpush1.bf16.msra.mxu0 %v1240
        %1263 = vmatprep.subr.bf16.mxu0 0
        %1264 = vmatpush1.bf16.msra.mxu0 %v1241
        %1265 = vmatprep.subr.bf16.mxu0 0
        %1266 = vmatpush1.bf16.msra.mxu0 %v1242
        %1267 = vmatprep.subr.bf16.mxu0 0
        %1268 = vmatpush1.bf16.msra.mxu0 0
        %1269 = vmatprep.subr.bf16.mxu0 0
        %1270 = vmatpush1.bf16.msra.mxu0 0
        %1271 = vmatprep.subr.bf16.mxu0 0
        %1272 = vmatpush1.bf16.msra.mxu0 0
        %1273 = vmatprep.subr.bf16.mxu0 0
        %1274 = vmatpush1.bf16.msra.mxu0 0
        %1275 = vmatprep.subr.bf16.mxu0 0
        %1276 = vmatpush1.bf16.msra.mxu0 0
        %1277 = vmatprep.subr.bf16.mxu0 0
        %1278 = vmatpush1.bf16.msra.mxu0 0
        %1279 = vmatprep.subr.bf16.mxu0 0
        %1280 = vmatpush1.bf16.msra.mxu0 0
        %1281 = vmatprep.subr.bf16.mxu0 0
        %1282 = vmatpush1.bf16.msra.mxu0 0
        %1283 = vmatprep.mubr.bf16.mxu0 0
        %1284 = vmatmul.mubr.bf16.gmra.mrb[0].mxu0 %v888
        %v1285 = vpop.f32.mrb[0].mxu0
        %v1286 = vadd.f32 %v1199, %v1285
        %v1287 = vpop.f32.mrb[0].mxu0
        %v1288 = vpop.f32.mrb[0].mxu0
        %v1289 = vadd.f32 %v1200, %v1288
        %v1290 = vpop.f32.mrb[0].mxu0
        %1291 = vmatprep.mubr.bf16.mxu0 0
        %1292 = vmatmul.mubr.bf16.gmra.mrb[0].mxu0 %v889
        %v1293 = vpop.f32.mrb[0].mxu0
        %v1294 = vadd.f32 %v1201, %v1293
        %v1295 = vpop.f32.mrb[0].mxu0
        %v1296 = vpop.f32.mrb[0].mxu0
        %v1297 = vadd.f32 %v1202, %v1296
        %v1298 = vpop.f32.mrb[0].mxu0
        %1299 = vdwg.mxu0
        %vm1300 = vcmp.eq.s32.totalorder %v1191, 31
        %vm1301 = vcmp.eq.s32.totalorder %v1192, 31
        %vm1302 = vcmp.eq.s32.totalorder %v1193, 31
        %vm1303 = vcmp.eq.s32.totalorder %v1194, 31
        %v1304 = vsel %vm1300, 0.0, %v1133
        %v1305 = vsel %vm1301, 0.0, %v1136
        %v1306 = vsel %vm1302, 0.0, %v1141
        %v1307 = vsel %vm1303, 0.0, %v1144
        %v1308 = vadd.f32 %v1286, %v1304
        %v1309 = vadd.f32 %v1289, %v1305
        %v1310 = vadd.f32 %v1294, %v1306
        %v1311 = vadd.f32 %v1297, %v1307
        %s1312 = scalar_lea.vmem [#allocation9], 2
        %v1313 = vld [vmem:[%s1312] sm:$0x3]
        %v1314 = vlaneseq
        %v1315 = vshrl.u32 %v1314, 7
        %v1316 = vsub.s32 0, %v1315
        %v1317 = vrot.slane %v1313, %v1316
        %v1318 = vmul.f32 %v1308, %v1317
        %v1319 = vmul.f32 %v1309, %v1317
        %v1320 = vmul.f32 %v1310, %v1317
        %v1321 = vmul.f32 %v1311, %v1317
        %v1322 = vlaneseq
        %v1323 = vshrl.u32 %v1322, 7
        %v1324 = vsub.s32 1, %v1323
        %v1325 = vrot.slane %v1313, %v1324
        %v1326 = vadd.f32 %v1318, %v1325
        %v1327 = vadd.f32 %v1319, %v1325
        %v1328 = vadd.f32 %v1320, %v1325
        %v1329 = vadd.f32 %v1321, %v1325
        %v1330 = vmax.f32 %v1326, 0.0
        %v1331 = vmax.f32 %v1327, 0.0
        %v1332 = vmax.f32 %v1328, 0.0
        %v1333 = vmax.f32 %v1329, 0.0
        %1334 = vst [vmem:[#allocation3] sm:$0xff] %v1330
        %1335 = vst [vmem:[#allocation3 + $0x8] sm:$0xff] %v1331
        %1336 = vst [vmem:[#allocation3 + $0x10] sm:$0xff] %v1332
        %1337 = vst [vmem:[#allocation3 + $0x18] sm:$0xff] %v1333
        %v1338 = vld [vmem:[#allocation3] ss:$2 sm:$0xff]
        %s1339 = scalar_lea.vmem [#allocation3], 16
        %v1340 = vld [vmem:[%s1339] ss:$2 sm:$0xff]
        %v1341 = vld [vmem:[%s872] ss:$2 sm:$0xff]
        %v1342 = vld [vmem:[%s874] ss:$2 sm:$0xff]
        %v1343 = vmax.f32 %v1338, %v1341
        %v1344 = vmax.f32 %v1340, %v1342
        %1345 = vst [vmem:[#allocation2 + $0x8] sm:$0xff] %v1343
        %1346 = vst [vmem:[#allocation2 + $0x10] sm:$0xff] %v1344
        %v1347 = vpack.c.bf16 %v1344, %v1343
        %s1348 = scalar_lea.vmem [#allocation7], 448
        %v1349 = vld [vmem:[%s1348] sm:$0xf]
        %v1350 = vld [vmem:[%s1348 + $0x4] sm:$0xf]
        %v1351 = vld [vmem:[%s1348 + $0x8] sm:$0xf]
        %v1352 = vld [vmem:[%s1348 + $0xc] sm:$0xf]
        %v1353 = vld [vmem:[%s1348 + $0x10] sm:$0xf]
        %v1354 = vld [vmem:[%s1348 + $0x14] sm:$0xf]
        %v1355 = vld [vmem:[%s1348 + $0x18] sm:$0xf]
        %v1356 = vld [vmem:[%s1348 + $0x1c] sm:$0xf]
        %v1357 = vld [vmem:[%s1348 + $0x20] sm:$0xf]
        %v1358 = vld [vmem:[%s1348 + $0x24] sm:$0xf]
        %v1359 = vld [vmem:[%s1348 + $0x28] sm:$0xf]
        %v1360 = vld [vmem:[%s1348 + $0x2c] sm:$0xf]
        %v1361 = vld [vmem:[%s1348 + $0x30] sm:$0xf]
        %v1362 = vld [vmem:[%s1348 + $0x34] sm:$0xf]
        %v1363 = vld [vmem:[%s1348 + $0x38] sm:$0xf]
        %v1364 = vld [vmem:[%s1348 + $0x3c] sm:$0xf]
        %v1365 = vld [vmem:[#allocation2 + $0x7] sm:$0xff]
        %v1366 = vld [vmem:[#allocation2 + $0xf] sm:$0xff]
        %v1367 = vpack.c.bf16 %v1366, %v1365
        %s1368 = scalar_lea.vmem [#allocation7], 384
        %v1369 = vld [vmem:[%s1368] sm:$0xf]
        %v1370 = vld [vmem:[%s1368 + $0x4] sm:$0xf]
        %v1371 = vld [vmem:[%s1368 + $0x8] sm:$0xf]
        %v1372 = vld [vmem:[%s1368 + $0xc] sm:$0xf]
        %v1373 = vld [vmem:[%s1368 + $0x10] sm:$0xf]
        %v1374 = vld [vmem:[%s1368 + $0x14] sm:$0xf]
        %v1375 = vld [vmem:[%s1368 + $0x18] sm:$0xf]
        %v1376 = vld [vmem:[%s1368 + $0x1c] sm:$0xf]
        %v1377 = vld [vmem:[%s1368 + $0x20] sm:$0xf]
        %v1378 = vld [vmem:[%s1368 + $0x24] sm:$0xf]
        %v1379 = vld [vmem:[%s1368 + $0x28] sm:$0xf]
        %v1380 = vld [vmem:[%s1368 + $0x2c] sm:$0xf]
        %v1381 = vld [vmem:[%s1368 + $0x30] sm:$0xf]
        %v1382 = vld [vmem:[%s1368 + $0x34] sm:$0xf]
        %v1383 = vld [vmem:[%s1368 + $0x38] sm:$0xf]
        %v1384 = vld [vmem:[%s1368 + $0x3c] sm:$0xf]
        %v1401 = vunpack.c.l.b16 %v1369
        %v1402 = vunpack.c.l.b16 %v1370
        %v1403 = vunpack.c.l.b16 %v1371
        %v1404 = vunpack.c.l.b16 %v1372
        %v1405 = vunpack.c.l.b16 %v1373
        %v1406 = vunpack.c.l.b16 %v1374
        %v1407 = vunpack.c.l.b16 %v1375
        %v1408 = vunpack.c.l.b16 %v1376
        %v1409 = vunpack.c.l.b16 %v1377
        %v1410 = vunpack.c.l.b16 %v1378
        %v1411 = vunpack.c.l.b16 %v1379
        %v1412 = vunpack.c.l.b16 %v1380
        %v1413 = vunpack.c.l.b16 %v1381
        %v1414 = vunpack.c.l.b16 %v1382
        %v1415 = vunpack.c.l.b16 %v1383
        %v1416 = vunpack.c.l.b16 %v1384
        %v1417 = vpack.c.b16 %v1402, %v1401
        %v1418 = vpack.c.b16 %v1404, %v1403
        %v1419 = vpack.c.b16 %v1406, %v1405
        %v1420 = vpack.c.b16 %v1408, %v1407
        %v1421 = vpack.c.b16 %v1410, %v1409
        %v1422 = vpack.c.b16 %v1412, %v1411
        %v1423 = vpack.c.b16 %v1414, %v1413
        %v1424 = vpack.c.b16 %v1416, %v1415
        %1433 = vmatprep.subr.bf16.mxu0 0
        %1434 = vmatpush1.bf16.msra.mxu0 %v1417
        %1435 = vmatprep.subr.bf16.mxu0 0
        %1436 = vmatpush1.bf16.msra.mxu0 %v1418
        %1437 = vmatprep.subr.bf16.mxu0 0
        %1438 = vmatpush1.bf16.msra.mxu0 %v1419
        %1439 = vmatprep.subr.bf16.mxu0 0
        %1440 = vmatpush1.bf16.msra.mxu0 %v1420
        %1441 = vmatprep.subr.bf16.mxu0 0
        %1442 = vmatpush1.bf16.msra.mxu0 %v1421
        %1443 = vmatprep.subr.bf16.mxu0 0
        %1444 = vmatpush1.bf16.msra.mxu0 %v1422
        %1445 = vmatprep.subr.bf16.mxu0 0
        %1446 = vmatpush1.bf16.msra.mxu0 %v1423
        %1447 = vmatprep.subr.bf16.mxu0 0
        %1448 = vmatpush1.bf16.msra.mxu0 %v1424
        %1449 = vmatprep.subr.bf16.mxu0 0
        %1450 = vmatpush1.bf16.msra.mxu0 0
        %1451 = vmatprep.subr.bf16.mxu0 0
        %1452 = vmatpush1.bf16.msra.mxu0 0
        %1453 = vmatprep.subr.bf16.mxu0 0
        %1454 = vmatpush1.bf16.msra.mxu0 0
        %1455 = vmatprep.subr.bf16.mxu0 0
        %1456 = vmatpush1.bf16.msra.mxu0 0
        %1457 = vmatprep.subr.bf16.mxu0 0
        %1458 = vmatpush1.bf16.msra.mxu0 0
        %1459 = vmatprep.subr.bf16.mxu0 0
        %1460 = vmatpush1.bf16.msra.mxu0 0
        %1461 = vmatprep.subr.bf16.mxu0 0
        %1462 = vmatpush1.bf16.msra.mxu0 0
        %1463 = vmatprep.subr.bf16.mxu0 0
        %1464 = vmatpush1.bf16.msra.mxu0 0
        %1465 = vmatprep.mubr.bf16.mxu0 0
        %1466 = vmatmul.mubr.bf16.gmra.mrb[0].mxu0 %v1367
        %v1467 = vpop.f32.mrb[0].mxu0
        %v1468 = vadd.f32 0.0, %v1467
        %v1469 = vpop.f32.mrb[0].mxu0
        %v1470 = vpop.f32.mrb[0].mxu0
        %v1471 = vadd.f32 0.0, %v1470
        %v1472 = vpop.f32.mrb[0].mxu0
        %1473 = vdwg.mxu0
        %v1474 = vld [vmem:[#allocation2 + $0x9] sm:$0xff]
        %v1475 = vld [vmem:[#allocation2 + $0x11] sm:$0xff]
        %v1476 = vpack.c.bf16 %v1475, %v1474
        %s1477 = scalar_lea.vmem [#allocation7], 512
        %v1478 = vld [vmem:[%s1477] sm:$0xf]
        %v1479 = vld [vmem:[%s1477 + $0x4] sm:$0xf]
        %v1480 = vld [vmem:[%s1477 + $0x8] sm:$0xf]
        %v1481 = vld [vmem:[%s1477 + $0xc] sm:$0xf]
        %v1482 = vld [vmem:[%s1477 + $0x10] sm:$0xf]
        %v1483 = vld [vmem:[%s1477 + $0x14] sm:$0xf]
        %v1484 = vld [vmem:[%s1477 + $0x18] sm:$0xf]
        %v1485 = vld [vmem:[%s1477 + $0x1c] sm:$0xf]
        %v1486 = vld [vmem:[%s1477 + $0x20] sm:$0xf]
        %v1487 = vld [vmem:[%s1477 + $0x24] sm:$0xf]
        %v1488 = vld [vmem:[%s1477 + $0x28] sm:$0xf]
        %v1489 = vld [vmem:[%s1477 + $0x2c] sm:$0xf]
        %v1490 = vld [vmem:[%s1477 + $0x30] sm:$0xf]
        %v1491 = vld [vmem:[%s1477 + $0x34] sm:$0xf]
        %v1492 = vld [vmem:[%s1477 + $0x38] sm:$0xf]
        %v1493 = vld [vmem:[%s1477 + $0x3c] sm:$0xf]
        %v1510 = vunpack.c.l.b16 %v1478
        %v1511 = vunpack.c.l.b16 %v1479
        %v1512 = vunpack.c.l.b16 %v1480
        %v1513 = vunpack.c.l.b16 %v1481
        %v1514 = vunpack.c.l.b16 %v1482
        %v1515 = vunpack.c.l.b16 %v1483
        %v1516 = vunpack.c.l.b16 %v1484
        %v1517 = vunpack.c.l.b16 %v1485
        %v1518 = vunpack.c.l.b16 %v1486
        %v1519 = vunpack.c.l.b16 %v1487
        %v1520 = vunpack.c.l.b16 %v1488
        %v1521 = vunpack.c.l.b16 %v1489
        %v1522 = vunpack.c.l.b16 %v1490
        %v1523 = vunpack.c.l.b16 %v1491
        %v1524 = vunpack.c.l.b16 %v1492
        %v1525 = vunpack.c.l.b16 %v1493
        %v1526 = vpack.c.b16 %v1511, %v1510
        %v1527 = vpack.c.b16 %v1513, %v1512
        %v1528 = vpack.c.b16 %v1515, %v1514
        %v1529 = vpack.c.b16 %v1517, %v1516
        %v1530 = vpack.c.b16 %v1519, %v1518
        %v1531 = vpack.c.b16 %v1521, %v1520
        %v1532 = vpack.c.b16 %v1523, %v1522
        %v1533 = vpack.c.b16 %v1525, %v1524
        %1542 = vmatprep.subr.bf16.mxu0 0
        %1543 = vmatpush1.bf16.msra.mxu0 %v1526
        %1544 = vmatprep.subr.bf16.mxu0 0
        %1545 = vmatpush1.bf16.msra.mxu0 %v1527
        %1546 = vmatprep.subr.bf16.mxu0 0
        %1547 = vmatpush1.bf16.msra.mxu0 %v1528
        %1548 = vmatprep.subr.bf16.mxu0 0
        %1549 = vmatpush1.bf16.msra.mxu0 %v1529
        %1550 = vmatprep.subr.bf16.mxu0 0
        %1551 = vmatpush1.bf16.msra.mxu0 %v1530
        %1552 = vmatprep.subr.bf16.mxu0 0
        %1553 = vmatpush1.bf16.msra.mxu0 %v1531
        %1554 = vmatprep.subr.bf16.mxu0 0
        %1555 = vmatpush1.bf16.msra.mxu0 %v1532
        %1556 = vmatprep.subr.bf16.mxu0 0
        %1557 = vmatpush1.bf16.msra.mxu0 %v1533
        %1558 = vmatprep.subr.bf16.mxu0 0
        %1559 = vmatpush1.bf16.msra.mxu0 0
        %1560 = vmatprep.subr.bf16.mxu0 0
        %1561 = vmatpush1.bf16.msra.mxu0 0
        %1562 = vmatprep.subr.bf16.mxu0 0
        %1563 = vmatpush1.bf16.msra.mxu0 0
        %1564 = vmatprep.subr.bf16.mxu0 0
        %1565 = vmatpush1.bf16.msra.mxu0 0
        %1566 = vmatprep.subr.bf16.mxu0 0
        %1567 = vmatpush1.bf16.msra.mxu0 0
        %1568 = vmatprep.subr.bf16.mxu0 0
        %1569 = vmatpush1.bf16.msra.mxu0 0
        %1570 = vmatprep.subr.bf16.mxu0 0
        %1571 = vmatpush1.bf16.msra.mxu0 0
        %1572 = vmatprep.subr.bf16.mxu0 0
        %1573 = vmatpush1.bf16.msra.mxu0 0
        %1574 = vmatprep.mubr.bf16.mxu0 0
        %1575 = vmatmul.mubr.bf16.gmra.mrb[0].mxu0 %v1476
        %v1576 = vpop.f32.mrb[0].mxu0
        %v1577 = vadd.f32 0.0, %v1576
        %v1578 = vpop.f32.mrb[0].mxu0
        %v1579 = vpop.f32.mrb[0].mxu0
        %v1580 = vadd.f32 0.0, %v1579
        %v1581 = vpop.f32.mrb[0].mxu0
        %1582 = vdwg.mxu0
        %vm1583 = vcmp.lt.s32.totalorder %v543, 0
        %v1584 = vsub.s32 0, %v543
        %v1585 = vsel %vm1583, %v1584, %v543
        %v1586 = vshrl.u32 %v1585, 4
        %v1587 = vand.u32 %v1585, 15
        %v1588 = vsub.s32 0, %v1587
        %v1589 = vsel %vm1583, %v1588, %v1587
        %vm1590 = vcmp.lt.s32.totalorder %v544, 0
        %v1591 = vsub.s32 0, %v544
        %v1592 = vsel %vm1590, %v1591, %v544
        %v1593 = vshrl.u32 %v1592, 4
        %v1594 = vand.u32 %v1592, 15
        %v1595 = vsub.s32 0, %v1594
        %v1596 = vsel %vm1590, %v1595, %v1594
        %vm1597 = vcmp.ne.s32.totalorder %v1589, 0
        %vm1598 = vcmp.ne.s32.totalorder %v1596, 0
        %vm1599 = vcmp.lt.s32.totalorder %v1589, 0
        %vm1600 = vcmp.lt.s32.totalorder %v1596, 0
        %vm1601 = vmand %vm1599, %vm1597
        %vm1602 = vmand %vm1600, %vm1598
        %v1603 = vadd.s32 %v1589, 16
        %v1604 = vadd.s32 %v1596, 16
        %v1605 = vsel %vm1601, %v1603, %v1589
        %v1606 = vsel %vm1602, %v1604, %v1596
        %vm1607 = vcmp.eq.s32.totalorder %v1605, 0
        %vm1608 = vcmp.eq.s32.totalorder %v1606, 0
        %v1609 = vsel %vm1607, 0.0, %v1468
        %v1610 = vsel %vm1608, 0.0, %v1471
        %v1627 = vunpack.c.l.b16 %v1349
        %v1628 = vunpack.c.l.b16 %v1350
        %v1629 = vunpack.c.l.b16 %v1351
        %v1630 = vunpack.c.l.b16 %v1352
        %v1631 = vunpack.c.l.b16 %v1353
        %v1632 = vunpack.c.l.b16 %v1354
        %v1633 = vunpack.c.l.b16 %v1355
        %v1634 = vunpack.c.l.b16 %v1356
        %v1635 = vunpack.c.l.b16 %v1357
        %v1636 = vunpack.c.l.b16 %v1358
        %v1637 = vunpack.c.l.b16 %v1359
        %v1638 = vunpack.c.l.b16 %v1360
        %v1639 = vunpack.c.l.b16 %v1361
        %v1640 = vunpack.c.l.b16 %v1362
        %v1641 = vunpack.c.l.b16 %v1363
        %v1642 = vunpack.c.l.b16 %v1364
        %v1643 = vpack.c.b16 %v1628, %v1627
        %v1644 = vpack.c.b16 %v1630, %v1629
        %v1645 = vpack.c.b16 %v1632, %v1631
        %v1646 = vpack.c.b16 %v1634, %v1633
        %v1647 = vpack.c.b16 %v1636, %v1635
        %v1648 = vpack.c.b16 %v1638, %v1637
        %v1649 = vpack.c.b16 %v1640, %v1639
        %v1650 = vpack.c.b16 %v1642, %v1641
        %1659 = vmatprep.subr.bf16.mxu0 0
        %1660 = vmatpush1.bf16.msra.mxu0 %v1643
        %1661 = vmatprep.subr.bf16.mxu0 0
        %1662 = vmatpush1.bf16.msra.mxu0 %v1644
        %1663 = vmatprep.subr.bf16.mxu0 0
        %1664 = vmatpush1.bf16.msra.mxu0 %v1645
        %1665 = vmatprep.subr.bf16.mxu0 0
        %1666 = vmatpush1.bf16.msra.mxu0 %v1646
        %1667 = vmatprep.subr.bf16.mxu0 0
        %1668 = vmatpush1.bf16.msra.mxu0 %v1647
        %1669 = vmatprep.subr.bf16.mxu0 0
        %1670 = vmatpush1.bf16.msra.mxu0 %v1648
        %1671 = vmatprep.subr.bf16.mxu0 0
        %1672 = vmatpush1.bf16.msra.mxu0 %v1649
        %1673 = vmatprep.subr.bf16.mxu0 0
        %1674 = vmatpush1.bf16.msra.mxu0 %v1650
        %1675 = vmatprep.subr.bf16.mxu0 0
        %1676 = vmatpush1.bf16.msra.mxu0 0
        %1677 = vmatprep.subr.bf16.mxu0 0
        %1678 = vmatpush1.bf16.msra.mxu0 0
        %1679 = vmatprep.subr.bf16.mxu0 0
        %1680 = vmatpush1.bf16.msra.mxu0 0
        %1681 = vmatprep.subr.bf16.mxu0 0
        %1682 = vmatpush1.bf16.msra.mxu0 0
        %1683 = vmatprep.subr.bf16.mxu0 0
        %1684 = vmatpush1.bf16.msra.mxu0 0
        %1685 = vmatprep.subr.bf16.mxu0 0
        %1686 = vmatpush1.bf16.msra.mxu0 0
        %1687 = vmatprep.subr.bf16.mxu0 0
        %1688 = vmatpush1.bf16.msra.mxu0 0
        %1689 = vmatprep.subr.bf16.mxu0 0
        %1690 = vmatpush1.bf16.msra.mxu0 0
        %1691 = vmatprep.mubr.bf16.mxu0 0
        %1692 = vmatmul.mubr.bf16.gmra.mrb[0].mxu0 %v1347
        %v1693 = vpop.f32.mrb[0].mxu0
        %v1694 = vadd.f32 %v1609, %v1693
        %v1695 = vpop.f32.mrb[0].mxu0
        %v1696 = vpop.f32.mrb[0].mxu0
        %v1697 = vadd.f32 %v1610, %v1696
        %v1698 = vpop.f32.mrb[0].mxu0
        %1699 = vdwg.mxu0
        %vm1700 = vcmp.eq.s32.totalorder %v1605, 15
        %vm1701 = vcmp.eq.s32.totalorder %v1606, 15
        %v1702 = vsel %vm1700, 0.0, %v1577
        %v1703 = vsel %vm1701, 0.0, %v1580
        %v1704 = vadd.f32 %v1694, %v1702
        %v1705 = vadd.f32 %v1697, %v1703
        %s1706 = scalar_lea.vmem [#allocation9], 4
        %v1707 = vld [vmem:[%s1706] sm:$0x3]
        %v1708 = vlaneseq
        %v1709 = vshrl.u32 %v1708, 7
        %v1710 = vsub.s32 0, %v1709
        %v1711 = vrot.slane %v1707, %v1710
        %v1712 = vmul.f32 %v1704, %v1711
        %v1713 = vmul.f32 %v1705, %v1711
        %v1714 = vlaneseq
        %v1715 = vshrl.u32 %v1714, 7
        %v1716 = vsub.s32 1, %v1715
        %v1717 = vrot.slane %v1707, %v1716
        %v1718 = vadd.f32 %v1712, %v1717
        %v1719 = vadd.f32 %v1713, %v1717
        %v1720 = vmax.f32 %v1718, 0.0
        %v1721 = vmax.f32 %v1719, 0.0
        %1722 = vst [vmem:[#allocation3] sm:$0xff] %v1720
        %1723 = vst [vmem:[#allocation3 + $0x8] sm:$0xff] %v1721
        %v1724 = vld [vmem:[#allocation3] ss:$2 sm:$0xff]
        %v1725 = vld [vmem:[%s872] ss:$2 sm:$0xff]
        %v1726 = vmax.f32 %v1724, %v1725
        %1727 = vst [vmem:[#allocation2 + $0x8] sm:$0xff] %v1726
        %v1728 = vpack.c.bf16 %v1726, %v1726
        %s1729 = scalar_lea.vmem [#allocation7], 640
        %v1730 = vld [vmem:[%s1729] sm:$0xf]
        %v1731 = vld [vmem:[%s1729 + $0x4] sm:$0xf]
        %v1732 = vld [vmem:[%s1729 + $0x8] sm:$0xf]
        %v1733 = vld [vmem:[%s1729 + $0xc] sm:$0xf]
        %v1734 = vld [vmem:[%s1729 + $0x10] sm:$0xf]
        %v1735 = vld [vmem:[%s1729 + $0x14] sm:$0xf]
        %v1736 = vld [vmem:[%s1729 + $0x18] sm:$0xf]
        %v1737 = vld [vmem:[%s1729 + $0x1c] sm:$0xf]
        %v1738 = vld [vmem:[%s1729 + $0x20] sm:$0xf]
        %v1739 = vld [vmem:[%s1729 + $0x24] sm:$0xf]
        %v1740 = vld [vmem:[%s1729 + $0x28] sm:$0xf]
        %v1741 = vld [vmem:[%s1729 + $0x2c] sm:$0xf]
        %v1742 = vld [vmem:[%s1729 + $0x30] sm:$0xf]
        %v1743 = vld [vmem:[%s1729 + $0x34] sm:$0xf]
        %v1744 = vld [vmem:[%s1729 + $0x38] sm:$0xf]
        %v1745 = vld [vmem:[%s1729 + $0x3c] sm:$0xf]
        %v1746 = vld [vmem:[#allocation2 + $0x7] sm:$0xff]
        %v1747 = vpack.c.bf16 %v1746, %v1746
        %s1748 = scalar_lea.vmem [#allocation7], 576
        %v1749 = vld [vmem:[%s1748] sm:$0xf]
        %v1750 = vld [vmem:[%s1748 + $0x4] sm:$0xf]
        %v1751 = vld [vmem:[%s1748 + $0x8] sm:$0xf]
        %v1752 = vld [vmem:[%s1748 + $0xc] sm:$0xf]
        %v1753 = vld [vmem:[%s1748 + $0x10] sm:$0xf]
        %v1754 = vld [vmem:[%s1748 + $0x14] sm:$0xf]
        %v1755 = vld [vmem:[%s1748 + $0x18] sm:$0xf]
        %v1756 = vld [vmem:[%s1748 + $0x1c] sm:$0xf]
        %v1757 = vld [vmem:[%s1748 + $0x20] sm:$0xf]
        %v1758 = vld [vmem:[%s1748 + $0x24] sm:$0xf]
        %v1759 = vld [vmem:[%s1748 + $0x28] sm:$0xf]
        %v1760 = vld [vmem:[%s1748 + $0x2c] sm:$0xf]
        %v1761 = vld [vmem:[%s1748 + $0x30] sm:$0xf]
        %v1762 = vld [vmem:[%s1748 + $0x34] sm:$0xf]
        %v1763 = vld [vmem:[%s1748 + $0x38] sm:$0xf]
        %v1764 = vld [vmem:[%s1748 + $0x3c] sm:$0xf]
        %v1781 = vunpack.c.l.b16 %v1749
        %v1782 = vunpack.c.l.b16 %v1750
        %v1783 = vunpack.c.l.b16 %v1751
        %v1784 = vunpack.c.l.b16 %v1752
        %v1785 = vunpack.c.l.b16 %v1753
        %v1786 = vunpack.c.l.b16 %v1754
        %v1787 = vunpack.c.l.b16 %v1755
        %v1788 = vunpack.c.l.b16 %v1756
        %v1789 = vunpack.c.l.b16 %v1757
        %v1790 = vunpack.c.l.b16 %v1758
        %v1791 = vunpack.c.l.b16 %v1759
        %v1792 = vunpack.c.l.b16 %v1760
        %v1793 = vunpack.c.l.b16 %v1761
        %v1794 = vunpack.c.l.b16 %v1762
        %v1795 = vunpack.c.l.b16 %v1763
        %v1796 = vunpack.c.l.b16 %v1764
        %v1797 = vpack.c.b16 %v1782, %v1781
        %v1798 = vpack.c.b16 %v1784, %v1783
        %v1799 = vpack.c.b16 %v1786, %v1785
        %v1800 = vpack.c.b16 %v1788, %v1787
        %v1801 = vpack.c.b16 %v1790, %v1789
        %v1802 = vpack.c.b16 %v1792, %v1791
        %v1803 = vpack.c.b16 %v1794, %v1793
        %v1804 = vpack.c.b16 %v1796, %v1795
        %1813 = vmatprep.subr.bf16.mxu0 0
        %1814 = vmatpush1.bf16.msra.mxu0 %v1797
        %1815 = vmatprep.subr.bf16.mxu0 0
        %1816 = vmatpush1.bf16.msra.mxu0 %v1798
        %1817 = vmatprep.subr.bf16.mxu0 0
        %1818 = vmatpush1.bf16.msra.mxu0 %v1799
        %1819 = vmatprep.subr.bf16.mxu0 0
        %1820 = vmatpush1.bf16.msra.mxu0 %v1800
        %1821 = vmatprep.subr.bf16.mxu0 0
        %1822 = vmatpush1.bf16.msra.mxu0 %v1801
        %1823 = vmatprep.subr.bf16.mxu0 0
        %1824 = vmatpush1.bf16.msra.mxu0 %v1802
        %1825 = vmatprep.subr.bf16.mxu0 0
        %1826 = vmatpush1.bf16.msra.mxu0 %v1803
        %1827 = vmatprep.subr.bf16.mxu0 0
        %1828 = vmatpush1.bf16.msra.mxu0 %v1804
        %1829 = vmatprep.subr.bf16.mxu0 0
        %1830 = vmatpush1.bf16.msra.mxu0 0
        %1831 = vmatprep.subr.bf16.mxu0 0
        %1832 = vmatpush1.bf16.msra.mxu0 0
        %1833 = vmatprep.subr.bf16.mxu0 0
        %1834 = vmatpush1.bf16.msra.mxu0 0
        %1835 = vmatprep.subr.bf16.mxu0 0
        %1836 = vmatpush1.bf16.msra.mxu0 0
        %1837 = vmatprep.subr.bf16.mxu0 0
        %1838 = vmatpush1.bf16.msra.mxu0 0
        %1839 = vmatprep.subr.bf16.mxu0 0
        %1840 = vmatpush1.bf16.msra.mxu0 0
        %1841 = vmatprep.subr.bf16.mxu0 0
        %1842 = vmatpush1.bf16.msra.mxu0 0
        %1843 = vmatprep.subr.bf16.mxu0 0
        %1844 = vmatpush1.bf16.msra.mxu0 0
        %1845 = vmatprep.mubr.bf16.mxu0 0
        %1846 = vmatmul.mubr.bf16.gmra.mrb[0].mxu0 %v1747
        %v1847 = vpop.f32.mrb[0].mxu0
        %v1848 = vadd.f32 0.0, %v1847
        %v1849 = vpop.f32.mrb[0].mxu0
        %v1850 = vpop.f32.mrb[0].mxu0
        %v1851 = vpop.f32.mrb[0].mxu0
        %1852 = vdwg.mxu0
        %v1853 = vld [vmem:[#allocation2 + $0x9] sm:$0xff]
        %v1854 = vpack.c.bf16 %v1853, %v1853
        %s1855 = scalar_lea.vmem [#allocation7], 704
        %v1856 = vld [vmem:[%s1855] sm:$0xf]
        %v1857 = vld [vmem:[%s1855 + $0x4] sm:$0xf]
        %v1858 = vld [vmem:[%s1855 + $0x8] sm:$0xf]
        %v1859 = vld [vmem:[%s1855 + $0xc] sm:$0xf]
        %v1860 = vld [vmem:[%s1855 + $0x10] sm:$0xf]
        %v1861 = vld [vmem:[%s1855 + $0x14] sm:$0xf]
        %v1862 = vld [vmem:[%s1855 + $0x18] sm:$0xf]
        %v1863 = vld [vmem:[%s1855 + $0x1c] sm:$0xf]
        %v1864 = vld [vmem:[%s1855 + $0x20] sm:$0xf]
        %v1865 = vld [vmem:[%s1855 + $0x24] sm:$0xf]
        %v1866 = vld [vmem:[%s1855 + $0x28] sm:$0xf]
        %v1867 = vld [vmem:[%s1855 + $0x2c] sm:$0xf]
        %v1868 = vld [vmem:[%s1855 + $0x30] sm:$0xf]
        %v1869 = vld [vmem:[%s1855 + $0x34] sm:$0xf]
        %v1870 = vld [vmem:[%s1855 + $0x38] sm:$0xf]
        %v1871 = vld [vmem:[%s1855 + $0x3c] sm:$0xf]
        %v1888 = vunpack.c.l.b16 %v1856
        %v1889 = vunpack.c.l.b16 %v1857
        %v1890 = vunpack.c.l.b16 %v1858
        %v1891 = vunpack.c.l.b16 %v1859
        %v1892 = vunpack.c.l.b16 %v1860
        %v1893 = vunpack.c.l.b16 %v1861
        %v1894 = vunpack.c.l.b16 %v1862
        %v1895 = vunpack.c.l.b16 %v1863
        %v1896 = vunpack.c.l.b16 %v1864
        %v1897 = vunpack.c.l.b16 %v1865
        %v1898 = vunpack.c.l.b16 %v1866
        %v1899 = vunpack.c.l.b16 %v1867
        %v1900 = vunpack.c.l.b16 %v1868
        %v1901 = vunpack.c.l.b16 %v1869
        %v1902 = vunpack.c.l.b16 %v1870
        %v1903 = vunpack.c.l.b16 %v1871
        %v1904 = vpack.c.b16 %v1889, %v1888
        %v1905 = vpack.c.b16 %v1891, %v1890
        %v1906 = vpack.c.b16 %v1893, %v1892
        %v1907 = vpack.c.b16 %v1895, %v1894
        %v1908 = vpack.c.b16 %v1897, %v1896
        %v1909 = vpack.c.b16 %v1899, %v1898
        %v1910 = vpack.c.b16 %v1901, %v1900
        %v1911 = vpack.c.b16 %v1903, %v1902
        %1920 = vmatprep.subr.bf16.mxu0 0
        %1921 = vmatpush1.bf16.msra.mxu0 %v1904
        %1922 = vmatprep.subr.bf16.mxu0 0
        %1923 = vmatpush1.bf16.msra.mxu0 %v1905
        %1924 = vmatprep.subr.bf16.mxu0 0
        %1925 = vmatpush1.bf16.msra.mxu0 %v1906
        %1926 = vmatprep.subr.bf16.mxu0 0
        %1927 = vmatpush1.bf16.msra.mxu0 %v1907
        %1928 = vmatprep.subr.bf16.mxu0 0
        %1929 = vmatpush1.bf16.msra.mxu0 %v1908
        %1930 = vmatprep.subr.bf16.mxu0 0
        %1931 = vmatpush1.bf16.msra.mxu0 %v1909
        %1932 = vmatprep.subr.bf16.mxu0 0
        %1933 = vmatpush1.bf16.msra.mxu0 %v1910
        %1934 = vmatprep.subr.bf16.mxu0 0
        %1935 = vmatpush1.bf16.msra.mxu0 %v1911
        %1936 = vmatprep.subr.bf16.mxu0 0
        %1937 = vmatpush1.bf16.msra.mxu0 0
        %1938 = vmatprep.subr.bf16.mxu0 0
        %1939 = vmatpush1.bf16.msra.mxu0 0
        %1940 = vmatprep.subr.bf16.mxu0 0
        %1941 = vmatpush1.bf16.msra.mxu0 0
        %1942 = vmatprep.subr.bf16.mxu0 0
        %1943 = vmatpush1.bf16.msra.mxu0 0
        %1944 = vmatprep.subr.bf16.mxu0 0
        %1945 = vmatpush1.bf16.msra.mxu0 0
        %1946 = vmatprep.subr.bf16.mxu0 0
        %1947 = vmatpush1.bf16.msra.mxu0 0
        %1948 = vmatprep.subr.bf16.mxu0 0
        %1949 = vmatpush1.bf16.msra.mxu0 0
        %1950 = vmatprep.subr.bf16.mxu0 0
        %1951 = vmatpush1.bf16.msra.mxu0 0
        %1952 = vmatprep.mubr.bf16.mxu0 0
        %1953 = vmatmul.mubr.bf16.gmra.mrb[0].mxu0 %v1854
        %v1954 = vpop.f32.mrb[0].mxu0
        %v1955 = vadd.f32 0.0, %v1954
        %v1956 = vpop.f32.mrb[0].mxu0
        %v1957 = vpop.f32.mrb[0].mxu0
        %v1958 = vpop.f32.mrb[0].mxu0
        %1959 = vdwg.mxu0
        %vm1960 = vcmp.lt.s32.totalorder %v543, 0
        %v1961 = vsub.s32 0, %v543
        %v1962 = vsel %vm1960, %v1961, %v543
        %v1963 = vshrl.u32 %v1962, 3
        %v1964 = vand.u32 %v1962, 7
        %v1965 = vsub.s32 0, %v1964
        %v1966 = vsel %vm1960, %v1965, %v1964
        %vm1967 = vcmp.ne.s32.totalorder %v1966, 0
        %vm1968 = vcmp.lt.s32.totalorder %v1966, 0
        %vm1969 = vmand %vm1968, %vm1967
        %v1970 = vadd.s32 %v1966, 8
        %v1971 = vsel %vm1969, %v1970, %v1966
        %vm1972 = vcmp.eq.s32.totalorder %v1971, 0
        %v1973 = vsel %vm1972, 0.0, %v1848
        %v1990 = vunpack.c.l.b16 %v1730
        %v1991 = vunpack.c.l.b16 %v1731
        %v1992 = vunpack.c.l.b16 %v1732
        %v1993 = vunpack.c.l.b16 %v1733
        %v1994 = vunpack.c.l.b16 %v1734
        %v1995 = vunpack.c.l.b16 %v1735
        %v1996 = vunpack.c.l.b16 %v1736
        %v1997 = vunpack.c.l.b16 %v1737
        %v1998 = vunpack.c.l.b16 %v1738
        %v1999 = vunpack.c.l.b16 %v1739
        %v2000 = vunpack.c.l.b16 %v1740
        %v2001 = vunpack.c.l.b16 %v1741
        %v2002 = vunpack.c.l.b16 %v1742
        %v2003 = vunpack.c.l.b16 %v1743
        %v2004 = vunpack.c.l.b16 %v1744
        %v2005 = vunpack.c.l.b16 %v1745
        %v2006 = vpack.c.b16 %v1991, %v1990
        %v2007 = vpack.c.b16 %v1993, %v1992
        %v2008 = vpack.c.b16 %v1995, %v1994
        %v2009 = vpack.c.b16 %v1997, %v1996
        %v2010 = vpack.c.b16 %v1999, %v1998
        %v2011 = vpack.c.b16 %v2001, %v2000
        %v2012 = vpack.c.b16 %v2003, %v2002
        %v2013 = vpack.c.b16 %v2005, %v2004
        %2022 = vmatprep.subr.bf16.mxu0 0
        %2023 = vmatpush1.bf16.msra.mxu0 %v2006
        %2024 = vmatprep.subr.bf16.mxu0 0
        %2025 = vmatpush1.bf16.msra.mxu0 %v2007
        %2026 = vmatprep.subr.bf16.mxu0 0
        %2027 = vmatpush1.bf16.msra.mxu0 %v2008
        %2028 = vmatprep.subr.bf16.mxu0 0
        %2029 = vmatpush1.bf16.msra.mxu0 %v2009
        %2030 = vmatprep.subr.bf16.mxu0 0
        %2031 = vmatpush1.bf16.msra.mxu0 %v2010
        %2032 = vmatprep.subr.bf16.mxu0 0
        %2033 = vmatpush1.bf16.msra.mxu0 %v2011
        %2034 = vmatprep.subr.bf16.mxu0 0
        %2035 = vmatpush1.bf16.msra.mxu0 %v2012
        %2036 = vmatprep.subr.bf16.mxu0 0
        %2037 = vmatpush1.bf16.msra.mxu0 %v2013
        %2038 = vmatprep.subr.bf16.mxu0 0
        %2039 = vmatpush1.bf16.msra.mxu0 0
        %2040 = vmatprep.subr.bf16.mxu0 0
        %2041 = vmatpush1.bf16.msra.mxu0 0
        %2042 = vmatprep.subr.bf16.mxu0 0
        %2043 = vmatpush1.bf16.msra.mxu0 0
        %2044 = vmatprep.subr.bf16.mxu0 0
        %2045 = vmatpush1.bf16.msra.mxu0 0
        %2046 = vmatprep.subr.bf16.mxu0 0
        %2047 = vmatpush1.bf16.msra.mxu0 0
        %2048 = vmatprep.subr.bf16.mxu0 0
        %2049 = vmatpush1.bf16.msra.mxu0 0
        %2050 = vmatprep.subr.bf16.mxu0 0
        %2051 = vmatpush1.bf16.msra.mxu0 0
        %2052 = vmatprep.subr.bf16.mxu0 0
        %2053 = vmatpush1.bf16.msra.mxu0 0
        %2054 = vmatprep.mubr.bf16.mxu0 0
        %2055 = vmatmul.mubr.bf16.gmra.mrb[0].mxu0 %v1728
        %v2056 = vpop.f32.mrb[0].mxu0
        %v2057 = vadd.f32 %v1973, %v2056
        %v2058 = vpop.f32.mrb[0].mxu0
        %v2059 = vpop.f32.mrb[0].mxu0
        %v2060 = vpop.f32.mrb[0].mxu0
        %2061 = vdwg.mxu0
        %vm2062 = vcmp.eq.s32.totalorder %v1971, 7
        %v2063 = vsel %vm2062, 0.0, %v1955
        %v2064 = vadd.f32 %v2057, %v2063
        %s2065 = scalar_lea.vmem [#allocation9], 6
        %v2066 = vld [vmem:[%s2065] sm:$0x3]
        %v2067 = vlaneseq
        %v2068 = vshrl.u32 %v2067, 7
        %v2069 = vsub.s32 0, %v2068
        %v2070 = vrot.slane %v2066, %v2069
        %v2071 = vmul.f32 %v2064, %v2070
        %v2072 = vlaneseq
        %v2073 = vshrl.u32 %v2072, 7
        %v2074 = vsub.s32 1, %v2073
        %v2075 = vrot.slane %v2066, %v2074
        %v2076 = vadd.f32 %v2071, %v2075
        %v2077 = vmax.f32 %v2076, 0.0
        %2078 = vst [vmem:[#allocation3] sm:$0xff] %v2077
        %v2079 = vld [vmem:[#allocation3] ss:$2 sm:$0xf]
        %v2080 = vld [vmem:[%s872] ss:$2 sm:$0xf]
        %v2081 = vmax.f32 %v2079, %v2080
        %2082 = vst [vmem:[#allocation2 + $0x8] sm:$0xf] %v2081
        %v2083 = vpack.c.bf16 %v2081, %v2081
        %s2084 = scalar_lea.vmem [#allocation7], 832
        %v2085 = vld [vmem:[%s2084] sm:$0xf]
        %v2086 = vld [vmem:[%s2084 + $0x4] sm:$0xf]
        %v2087 = vld [vmem:[%s2084 + $0x8] sm:$0xf]
        %v2088 = vld [vmem:[%s2084 + $0xc] sm:$0xf]
        %v2089 = vld [vmem:[%s2084 + $0x10] sm:$0xf]
        %v2090 = vld [vmem:[%s2084 + $0x14] sm:$0xf]
        %v2091 = vld [vmem:[%s2084 + $0x18] sm:$0xf]
        %v2092 = vld [vmem:[%s2084 + $0x1c] sm:$0xf]
        %v2093 = vld [vmem:[%s2084 + $0x20] sm:$0xf]
        %v2094 = vld [vmem:[%s2084 + $0x24] sm:$0xf]
        %v2095 = vld [vmem:[%s2084 + $0x28] sm:$0xf]
        %v2096 = vld [vmem:[%s2084 + $0x2c] sm:$0xf]
        %v2097 = vld [vmem:[%s2084 + $0x30] sm:$0xf]
        %v2098 = vld [vmem:[%s2084 + $0x34] sm:$0xf]
        %v2099 = vld [vmem:[%s2084 + $0x38] sm:$0xf]
        %v2100 = vld [vmem:[%s2084 + $0x3c] sm:$0xf]
        %v2101 = vld [vmem:[#allocation2 + $0x7] sm:$0xf]
        %v2102 = vpack.c.bf16 %v2101, %v2101
        %s2103 = scalar_lea.vmem [#allocation7], 768
        %v2104 = vld [vmem:[%s2103] sm:$0xf]
        %v2105 = vld [vmem:[%s2103 + $0x4] sm:$0xf]
        %v2106 = vld [vmem:[%s2103 + $0x8] sm:$0xf]
        %v2107 = vld [vmem:[%s2103 + $0xc] sm:$0xf]
        %v2108 = vld [vmem:[%s2103 + $0x10] sm:$0xf]
        %v2109 = vld [vmem:[%s2103 + $0x14] sm:$0xf]
        %v2110 = vld [vmem:[%s2103 + $0x18] sm:$0xf]
        %v2111 = vld [vmem:[%s2103 + $0x1c] sm:$0xf]
        %v2112 = vld [vmem:[%s2103 + $0x20] sm:$0xf]
        %v2113 = vld [vmem:[%s2103 + $0x24] sm:$0xf]
        %v2114 = vld [vmem:[%s2103 + $0x28] sm:$0xf]
        %v2115 = vld [vmem:[%s2103 + $0x2c] sm:$0xf]
        %v2116 = vld [vmem:[%s2103 + $0x30] sm:$0xf]
        %v2117 = vld [vmem:[%s2103 + $0x34] sm:$0xf]
        %v2118 = vld [vmem:[%s2103 + $0x38] sm:$0xf]
        %v2119 = vld [vmem:[%s2103 + $0x3c] sm:$0xf]
        %v2136 = vunpack.c.l.b16 %v2104
        %v2137 = vunpack.c.l.b16 %v2105
        %v2138 = vunpack.c.l.b16 %v2106
        %v2139 = vunpack.c.l.b16 %v2107
        %v2140 = vunpack.c.l.b16 %v2108
        %v2141 = vunpack.c.l.b16 %v2109
        %v2142 = vunpack.c.l.b16 %v2110
        %v2143 = vunpack.c.l.b16 %v2111
        %v2144 = vunpack.c.l.b16 %v2112
        %v2145 = vunpack.c.l.b16 %v2113
        %v2146 = vunpack.c.l.b16 %v2114
        %v2147 = vunpack.c.l.b16 %v2115
        %v2148 = vunpack.c.l.b16 %v2116
        %v2149 = vunpack.c.l.b16 %v2117
        %v2150 = vunpack.c.l.b16 %v2118
        %v2151 = vunpack.c.l.b16 %v2119
        %v2152 = vpack.c.b16 %v2137, %v2136
        %v2153 = vpack.c.b16 %v2139, %v2138
        %v2154 = vpack.c.b16 %v2141, %v2140
        %v2155 = vpack.c.b16 %v2143, %v2142
        %v2156 = vpack.c.b16 %v2145, %v2144
        %v2157 = vpack.c.b16 %v2147, %v2146
        %v2158 = vpack.c.b16 %v2149, %v2148
        %v2159 = vpack.c.b16 %v2151, %v2150
        %2168 = vmatprep.subr.bf16.mxu0 0
        %2169 = vmatpush1.bf16.msra.mxu0 %v2152
        %2170 = vmatprep.subr.bf16.mxu0 0
        %2171 = vmatpush1.bf16.msra.mxu0 %v2153
        %2172 = vmatprep.subr.bf16.mxu0 0
        %2173 = vmatpush1.bf16.msra.mxu0 %v2154
        %2174 = vmatprep.subr.bf16.mxu0 0
        %2175 = vmatpush1.bf16.msra.mxu0 %v2155
        %2176 = vmatprep.subr.bf16.mxu0 0
        %2177 = vmatpush1.bf16.msra.mxu0 %v2156
        %2178 = vmatprep.subr.bf16.mxu0 0
        %2179 = vmatpush1.bf16.msra.mxu0 %v2157
        %2180 = vmatprep.subr.bf16.mxu0 0
        %2181 = vmatpush1.bf16.msra.mxu0 %v2158
        %2182 = vmatprep.subr.bf16.mxu0 0
        %2183 = vmatpush1.bf16.msra.mxu0 %v2159
        %2184 = vmatprep.subr.bf16.mxu0 0
        %2185 = vmatpush1.bf16.msra.mxu0 0
        %2186 = vmatprep.subr.bf16.mxu0 0
        %2187 = vmatpush1.bf16.msra.mxu0 0
        %2188 = vmatprep.subr.bf16.mxu0 0
        %2189 = vmatpush1.bf16.msra.mxu0 0
        %2190 = vmatprep.subr.bf16.mxu0 0
        %2191 = vmatpush1.bf16.msra.mxu0 0
        %2192 = vmatprep.subr.bf16.mxu0 0
        %2193 = vmatpush1.bf16.msra.mxu0 0
        %2194 = vmatprep.subr.bf16.mxu0 0
        %2195 = vmatpush1.bf16.msra.mxu0 0
        %2196 = vmatprep.subr.bf16.mxu0 0
        %2197 = vmatpush1.bf16.msra.mxu0 0
        %2198 = vmatprep.subr.bf16.mxu0 0
        %2199 = vmatpush1.bf16.msra.mxu0 0
        %2200 = vmatprep.mubr.bf16.mxu0 0
        %2201 = vmatmul.mubr.bf16.gmra.mrb[0].mxu0 %v2102
        %v2202 = vpop.f32.mrb[0].mxu0
        %v2203 = vadd.f32 0.0, %v2202
        %v2204 = vpop.f32.mrb[0].mxu0
        %v2205 = vpop.f32.mrb[0].mxu0
        %v2206 = vpop.f32.mrb[0].mxu0
        %2207 = vdwg.mxu0
        %v2208 = vld [vmem:[#allocation2 + $0x9] sm:$0xf]
        %v2209 = vpack.c.bf16 %v2208, %v2208
        %s2210 = scalar_lea.vmem [#allocation7], 896
        %v2211 = vld [vmem:[%s2210] sm:$0xf]
        %v2212 = vld [vmem:[%s2210 + $0x4] sm:$0xf]
        %v2213 = vld [vmem:[%s2210 + $0x8] sm:$0xf]
        %v2214 = vld [vmem:[%s2210 + $0xc] sm:$0xf]
        %v2215 = vld [vmem:[%s2210 + $0x10] sm:$0xf]
        %v2216 = vld [vmem:[%s2210 + $0x14] sm:$0xf]
        %v2217 = vld [vmem:[%s2210 + $0x18] sm:$0xf]
        %v2218 = vld [vmem:[%s2210 + $0x1c] sm:$0xf]
        %v2219 = vld [vmem:[%s2210 + $0x20] sm:$0xf]
        %v2220 = vld [vmem:[%s2210 + $0x24] sm:$0xf]
        %v2221 = vld [vmem:[%s2210 + $0x28] sm:$0xf]
        %v2222 = vld [vmem:[%s2210 + $0x2c] sm:$0xf]
        %v2223 = vld [vmem:[%s2210 + $0x30] sm:$0xf]
        %v2224 = vld [vmem:[%s2210 + $0x34] sm:$0xf]
        %v2225 = vld [vmem:[%s2210 + $0x38] sm:$0xf]
        %v2226 = vld [vmem:[%s2210 + $0x3c] sm:$0xf]
        %v2243 = vunpack.c.l.b16 %v2211
        %v2244 = vunpack.c.l.b16 %v2212
        %v2245 = vunpack.c.l.b16 %v2213
        %v2246 = vunpack.c.l.b16 %v2214
        %v2247 = vunpack.c.l.b16 %v2215
        %v2248 = vunpack.c.l.b16 %v2216
        %v2249 = vunpack.c.l.b16 %v2217
        %v2250 = vunpack.c.l.b16 %v2218
        %v2251 = vunpack.c.l.b16 %v2219
        %v2252 = vunpack.c.l.b16 %v2220
        %v2253 = vunpack.c.l.b16 %v2221
        %v2254 = vunpack.c.l.b16 %v2222
        %v2255 = vunpack.c.l.b16 %v2223
        %v2256 = vunpack.c.l.b16 %v2224
        %v2257 = vunpack.c.l.b16 %v2225
        %v2258 = vunpack.c.l.b16 %v2226
        %v2259 = vpack.c.b16 %v2244, %v2243
        %v2260 = vpack.c.b16 %v2246, %v2245
        %v2261 = vpack.c.b16 %v2248, %v2247
        %v2262 = vpack.c.b16 %v2250, %v2249
        %v2263 = vpack.c.b16 %v2252, %v2251
        %v2264 = vpack.c.b16 %v2254, %v2253
        %v2265 = vpack.c.b16 %v2256, %v2255
        %v2266 = vpack.c.b16 %v2258, %v2257
        %2275 = vmatprep.subr.bf16.mxu0 0
        %2276 = vmatpush1.bf16.msra.mxu0 %v2259
        %2277 = vmatprep.subr.bf16.mxu0 0
        %2278 = vmatpush1.bf16.msra.mxu0 %v2260
        %2279 = vmatprep.subr.bf16.mxu0 0
        %2280 = vmatpush1.bf16.msra.mxu0 %v2261
        %2281 = vmatprep.subr.bf16.mxu0 0
        %2282 = vmatpush1.bf16.msra.mxu0 %v2262
        %2283 = vmatprep.subr.bf16.mxu0 0
        %2284 = vmatpush1.bf16.msra.mxu0 %v2263
        %2285 = vmatprep.subr.bf16.mxu0 0
        %2286 = vmatpush1.bf16.msra.mxu0 %v2264
        %2287 = vmatprep.subr.bf16.mxu0 0
        %2288 = vmatpush1.bf16.msra.mxu0 %v2265
        %2289 = vmatprep.subr.bf16.mxu0 0
        %2290 = vmatpush1.bf16.msra.mxu0 %v2266
        %2291 = vmatprep.subr.bf16.mxu0 0
        %2292 = vmatpush1.bf16.msra.mxu0 0
        %2293 = vmatprep.subr.bf16.mxu0 0
        %2294 = vmatpush1.bf16.msra.mxu0 0
        %2295 = vmatprep.subr.bf16.mxu0 0
        %2296 = vmatpush1.bf16.msra.mxu0 0
        %2297 = vmatprep.subr.bf16.mxu0 0
        %2298 = vmatpush1.bf16.msra.mxu0 0
        %2299 = vmatprep.subr.bf16.mxu0 0
        %2300 = vmatpush1.bf16.msra.mxu0 0
        %2301 = vmatprep.subr.bf16.mxu0 0
        %2302 = vmatpush1.bf16.msra.mxu0 0
        %2303 = vmatprep.subr.bf16.mxu0 0
        %2304 = vmatpush1.bf16.msra.mxu0 0
        %2305 = vmatprep.subr.bf16.mxu0 0
        %2306 = vmatpush1.bf16.msra.mxu0 0
        %2307 = vmatprep.mubr.bf16.mxu0 0
        %2308 = vmatmul.mubr.bf16.gmra.mrb[0].mxu0 %v2209
        %v2309 = vpop.f32.mrb[0].mxu0
        %v2310 = vadd.f32 0.0, %v2309
        %v2311 = vpop.f32.mrb[0].mxu0
        %v2312 = vpop.f32.mrb[0].mxu0
        %v2313 = vpop.f32.mrb[0].mxu0
        %2314 = vdwg.mxu0
        %vm2315 = vcmp.lt.s32.totalorder %v543, 0
        %v2316 = vsub.s32 0, %v543
        %v2317 = vsel %vm2315, %v2316, %v543
        %v2318 = vshrl.u32 %v2317, 2
        %v2319 = vand.u32 %v2317, 3
        %v2320 = vsub.s32 0, %v2319
        %v2321 = vsel %vm2315, %v2320, %v2319
        %vm2322 = vcmp.ne.s32.totalorder %v2321, 0
        %vm2323 = vcmp.lt.s32.totalorder %v2321, 0
        %vm2324 = vmand %vm2323, %vm2322
        %v2325 = vadd.s32 %v2321, 4
        %v2326 = vsel %vm2324, %v2325, %v2321
        %vm2327 = vcmp.eq.s32.totalorder %v2326, 0
        %v2328 = vsel %vm2327, 0.0, %v2203
        %v2345 = vunpack.c.l.b16 %v2085
        %v2346 = vunpack.c.l.b16 %v2086
        %v2347 = vunpack.c.l.b16 %v2087
        %v2348 = vunpack.c.l.b16 %v2088
        %v2349 = vunpack.c.l.b16 %v2089
        %v2350 = vunpack.c.l.b16 %v2090
        %v2351 = vunpack.c.l.b16 %v2091
        %v2352 = vunpack.c.l.b16 %v2092
        %v2353 = vunpack.c.l.b16 %v2093
        %v2354 = vunpack.c.l.b16 %v2094
        %v2355 = vunpack.c.l.b16 %v2095
        %v2356 = vunpack.c.l.b16 %v2096
        %v2357 = vunpack.c.l.b16 %v2097
        %v2358 = vunpack.c.l.b16 %v2098
        %v2359 = vunpack.c.l.b16 %v2099
        %v2360 = vunpack.c.l.b16 %v2100
        %v2361 = vpack.c.b16 %v2346, %v2345
        %v2362 = vpack.c.b16 %v2348, %v2347
        %v2363 = vpack.c.b16 %v2350, %v2349
        %v2364 = vpack.c.b16 %v2352, %v2351
        %v2365 = vpack.c.b16 %v2354, %v2353
        %v2366 = vpack.c.b16 %v2356, %v2355
        %v2367 = vpack.c.b16 %v2358, %v2357
        %v2368 = vpack.c.b16 %v2360, %v2359
        %2377 = vmatprep.subr.bf16.mxu0 0
        %2378 = vmatpush1.bf16.msra.mxu0 %v2361
        %2379 = vmatprep.subr.bf16.mxu0 0
        %2380 = vmatpush1.bf16.msra.mxu0 %v2362
        %2381 = vmatprep.subr.bf16.mxu0 0
        %2382 = vmatpush1.bf16.msra.mxu0 %v2363
        %2383 = vmatprep.subr.bf16.mxu0 0
        %2384 = vmatpush1.bf16.msra.mxu0 %v2364
        %2385 = vmatprep.subr.bf16.mxu0 0
        %2386 = vmatpush1.bf16.msra.mxu0 %v2365
        %2387 = vmatprep.subr.bf16.mxu0 0
        %2388 = vmatpush1.bf16.msra.mxu0 %v2366
        %2389 = vmatprep.subr.bf16.mxu0 0
        %2390 = vmatpush1.bf16.msra.mxu0 %v2367
        %2391 = vmatprep.subr.bf16.mxu0 0
        %2392 = vmatpush1.bf16.msra.mxu0 %v2368
        %2393 = vmatprep.subr.bf16.mxu0 0
        %2394 = vmatpush1.bf16.msra.mxu0 0
        %2395 = vmatprep.subr.bf16.mxu0 0
        %2396 = vmatpush1.bf16.msra.mxu0 0
        %2397 = vmatprep.subr.bf16.mxu0 0
        %2398 = vmatpush1.bf16.msra.mxu0 0
        %2399 = vmatprep.subr.bf16.mxu0 0
        %2400 = vmatpush1.bf16.msra.mxu0 0
        %2401 = vmatprep.subr.bf16.mxu0 0
        %2402 = vmatpush1.bf16.msra.mxu0 0
        %2403 = vmatprep.subr.bf16.mxu0 0
        %2404 = vmatpush1.bf16.msra.mxu0 0
        %2405 = vmatprep.subr.bf16.mxu0 0
        %2406 = vmatpush1.bf16.msra.mxu0 0
        %2407 = vmatprep.subr.bf16.mxu0 0
        %2408 = vmatpush1.bf16.msra.mxu0 0
        %2409 = vmatprep.mubr.bf16.mxu0 0
        %2410 = vmatmul.mubr.bf16.gmra.mrb[0].mxu0 %v2083
        %v2411 = vpop.f32.mrb[0].mxu0
        %v2412 = vadd.f32 %v2328, %v2411
        %v2413 = vpop.f32.mrb[0].mxu0
        %v2414 = vpop.f32.mrb[0].mxu0
        %v2415 = vpop.f32.mrb[0].mxu0
        %2416 = vdwg.mxu0
        %vm2417 = vcmp.eq.s32.totalorder %v2326, 3
        %v2418 = vsel %vm2417, 0.0, %v2310
        %v2419 = vadd.f32 %v2412, %v2418
        %s2420 = scalar_lea.vmem [#allocation9], 8
        %v2421 = vld [vmem:[%s2420] sm:$0x3]
        %v2422 = vlaneseq
        %v2423 = vshrl.u32 %v2422, 7
        %v2424 = vsub.s32 0, %v2423
        %v2425 = vrot.slane %v2421, %v2424
        %v2426 = vmul.f32 %v2419, %v2425
        %v2427 = vlaneseq
        %v2428 = vshrl.u32 %v2427, 7
        %v2429 = vsub.s32 1, %v2428
        %v2430 = vrot.slane %v2421, %v2429
        %v2431 = vadd.f32 %v2426, %v2430
        %v2432 = vmax.f32 %v2431, 0.0
        %2433 = vst [vmem:[#allocation3] sm:$0xf] %v2432
        %v2434 = vld [vmem:[#allocation3] ss:$4 sm:$0x1]
        %v2435 = vld [vmem:[%s872] ss:$4 sm:$0x1]
        %v2436 = vmax.f32 %v2434, %v2435
        %s2437 = scalar_lea.vmem [#allocation3], 2
        %v2438 = vld [vmem:[%s2437] ss:$4 sm:$0x1]
        %v2439 = vmax.f32 %v2436, %v2438
        %s2440 = scalar_lea.vmem [#allocation3], 3
        %v2441 = vld [vmem:[%s2440] ss:$4 sm:$0x1]
        %v2442 = vmax.f32 %v2439, %v2441
        %2443 = vst [vmem:[%s216] sm:$0x1] %v2442
        %s2444 = sand.u32 %s97, 1
        %s2445 = scalar_lea.sflag [#allocation6], %s2444
        %s2446 = sand.u32 %s97, 1
        %s2447 = scalar_lea.vmem [#allocation10], %s2446
        // Predicated region
        $region45: #{tpu_custom_call.1} parent=31 // pred_check
          %p2448 = pneg %p107
        $region46: #{tpu_custom_call.1} parent=31 // pred_check_branch
          %2450 = sbr.rel (%p2448) target = $region48
        $region47: #{tpu_custom_call.1} parent=31 // pred_region
          %s2452 = ssub.s32 16, 16
          %2453 = vsyncadd %s2445, %s2452
          %s2454 = smul.addr %s21, 16
          %s2455 = scalar_lea.hbm %s3, %s2454
          %s2457 = sshll.u32 %s2447, 4
          %s2458 = int_to_ptr.vmem [resolvable:$true] %s2457
          %2460 = dma.vmem_to_hbm [thread:$0]  %s2458, 16, %s2455, %s2445
        $region48: #{tpu_custom_call.1} parent=31 // pred_fallthru
          _
      $region32: #{tpu_custom_call.1} parent=5 // pred_fallthru
        _
      %p2461 = scmp.le.s32.totalorder 2, %s16
      // Predicated region
      $region49: #{tpu_custom_call.1} parent=5 // pred_check
        %p2462 = pneg %p2461
      $region50: #{tpu_custom_call.1} parent=5 // pred_check_branch
        %2464 = sbr.rel (%p2462) target = $region52
      $region51: #{tpu_custom_call.1} parent=5 // pred_region
        %s2465 = ssub.s32 %s16, 2
        // Predicated region
        $region53: #{tpu_custom_call.1} parent=51 // pred_check
          %p2466 = pneg %p113
        $region54: #{tpu_custom_call.1} parent=51 // pred_check_branch
          %2468 = sbr.rel (%p2466) target = $region56
        $region55: #{tpu_custom_call.1} parent=51 // pred_region
          %s2469 = sand.u32 %s98, 1
          %s2470 = scalar_lea.sflag [#allocation6], %s2469
          %s2471 = sand.u32 %s98, 1
          %s2472 = scalar_lea.vmem [#allocation10], %s2471
          %2473 = dma.done %s2470, 16
        $region56: #{tpu_custom_call.1} parent=51 // pred_fallthru
          _
      $region52: #{tpu_custom_call.1} parent=5 // pred_fallthru
        _
    $region6: #{tpu_custom_call.1} parent=1 // loop_footer
      %s20 = sadd.s32 1, %s16
    $region7: #{tpu_custom_call.1} parent=1 // loop_footer_branch
      %15 = sbr.rel target = $region3
    $region8: #{tpu_custom_call.1} parent=1 // loop_exit
      _
    %2474 = vsyncpa [#allocation5], 1
    %s2475 = scalar_lea.sflag [#allocation5], 1
    %2476 = vsyncpa %s2475, 1
    %2477 = vsyncpa [#allocation8], 1
    %2478 = vsyncpa [#allocation6], 1
    %s2479 = scalar_lea.sflag [#allocation6], 1
    %2480 = vsyncpa %s2479, 1

</llo_original>
